<compile_context>
chip_gen: v7x
topology: tpu7x:2x2x1
jax: 0.10.0
libtpu: 0.0.40
codegen_flags: <defaults>
</compile_context>

<pallas_src>
import functools

import jax
import jax.numpy as jnp
from jax import lax
from jax.experimental import pallas as pl
from jax.experimental.pallas import tpu as pltpu

NEG_SLOPE = 0.01  # nn.LeakyReLU default


def _leaky_relu(x):
    # 2 VALU ops (mul + max) instead of cmp + mul + select.
    return jnp.maximum(x, NEG_SLOPE * x)


def relpointnet_kernel(x_ref, w0e_ref, w1_ref, b1_ref, w2_ref, b2_ref,
                       local_ref, gmax_ref, mscr_ref, *, n_points, n_tiles):
    """Grid = (B, n_tiles).  Channel-major compute: h is (C, TN)."""
    nt = pl.program_id(1)
    tile_n = x_ref.shape[-1]

    # ---- layer 0 on the VPU (a K=3 matmul would waste a full MXU pass) --------
    # x rows 0..2 = raw xyz, row 3 = 1.0.  rot / trans / *10 / bias are folded
    # into w0e per batch element (column 3 is the folded bias).
    x = x_ref[0]                        # (4, TN)  f32
    w0e = w0e_ref[0]                    # (C0, 4)  f32
    h = w0e[:, 0:1] * x[0:1, :]
    h = h + w0e[:, 1:2] * x[1:2, :]
    h = h + w0e[:, 2:3] * x[2:3, :]
    h = h + w0e[:, 3:4] * x[3:4, :]
    h = _leaky_relu(h)                  # (C0, TN) f32

    # ---- layers 1 / 2 on the MXU in bf16, f32 accumulate ----------------------
    h = _leaky_relu(jnp.dot(w1_ref[...], h.astype(jnp.bfloat16),
                            preferred_element_type=jnp.float32) + b1_ref[...])
    h = _leaky_relu(jnp.dot(w2_ref[...], h.astype(jnp.bfloat16),
                            preferred_element_type=jnp.float32) + b2_ref[...])   # (C2, TN) f32

    local_ref[0] = h.astype(local_ref.dtype)           # lane-dense (C2, N-tile) store

    # ---- channel-wise max over points -----------------------------------------
    if n_tiles == 1:
        # Single tile covers exactly N points (tile_n == N): one lane reduction.
        gmax_ref[0] = jnp.max(h, axis=1, keepdims=True)
        return

    is_last = nt == n_tiles - 1

    @pl.when(nt == 0)
    def _init():
        mscr_ref[...] = jnp.full(mscr_ref.shape, -jnp.inf, mscr_ref.dtype)
        gmax_ref[...] = jnp.full(gmax_ref.shape, -jnp.inf, gmax_ref.dtype)

    def _accumulate(hv):
        # Running element-wise max on the VPU over lane-aligned 128-wide chunks.
        m = mscr_ref[...]
        for c in range(tile_n // 128):
            m = jnp.maximum(m, hv[:, c * 128:(c + 1) * 128])
        mscr_ref[...] = m

    if n_points % tile_n != 0:
        # Only the last (padded) tile pays for the tail mask.
        @pl.when(is_last)
        def _acc_masked():
            col = lax.broadcasted_iota(jnp.int32, (1, tile_n), 1) + nt * tile_n
            _accumulate(jnp.where(col < n_points, h, -jnp.inf))

        @pl.when(jnp.logical_not(is_last))
        def _acc_plain():
            _accumulate(h)
    else:
        _accumulate(h)

    @pl.when(is_last)
    def _finish():
        # Single cross-lane (XLU) reduce per batch element, not per tile.
        gmax_ref[0] = jnp.max(mscr_ref[...], axis=1, keepdims=True)


def rel_pointnet_forward(x, rot, trans, params, *, max_tile_n=2048,
                         local_dtype=jnp.float32):
    """x: (B, N, K) with K >= 3, rot: (B, 3, 3), trans: (B, 3).
    Returns (global_feature (B, pc_feature_dim), local_feature (B, C_local, N))."""
    B, N, K = x.shape
    # Parameters are in PyTorch layout: conv/linear weights (out, in), biases (out,)
    w0, b0, w1, b1, w2, b2, wm0, bm0, wm1, bm1 = params
    C0, C1, C2 = w0.shape[0], w1.shape[0], w2.shape[0]

    # ---- cheap O(B) wrapper-side preprocessing --------------------------------
    # Fold rot / trans / *10 / bias into layer 0:
    #   h0 = W0eff @ [xyz; 1]  with  W0eff = [ 10*W0@rot^T | b0 - (10*W0@rot^T)@trans ]
    w0_rot = 10.0 * jnp.einsum('nba,oa->nob', rot, w0)                 # (B, C0, 3)
    b0_eff = b0[None, :] - jnp.einsum('nob,nb->no', w0_rot, trans)     # (B, C0)
    w0_eff = jnp.concatenate([w0_rot, b0_eff[..., None]], axis=-1)     # (B, C0, 4)
    w0_eff = w0_eff.astype(jnp.float32)

    # Channel-major input with an appended constant-1 channel: (B, 4, N).
    xT = jnp.swapaxes(x[..., :3], 1, 2).astype(jnp.float32)
    x4 = jnp.concatenate([xT, jnp.ones((B, 1, N), jnp.float32)], axis=1)

    # bf16 weights for the MXU; biases stay f32 (added to the f32 accumulator).
    w1b = w1.astype(jnp.bfloat16)
    w2b = w2.astype(jnp.bfloat16)
    b1c = b1.reshape(C1, 1).astype(jnp.float32)
    b2c = b2.reshape(C2, 1).astype(jnp.float32)

    # ---- tiling ----------------------------------------------------------------
    assert max_tile_n % 128 == 0
    tile_n = N if N <= max_tile_n else max_tile_n      # full N, or a 128-multiple
    num_n_tiles = pl.cdiv(N, tile_n)

    kernel = functools.partial(relpointnet_kernel, n_points=N, n_tiles=num_n_tiles)

    def resident(a):  # same block every grid step -> stays resident in VMEM
        return pl.BlockSpec(a.shape, lambda b, n: (0,) * a.ndim)

    local, gmax = pl.pallas_call(
        kernel,
        out_shape=(
            jax.ShapeDtypeStruct((B, C2, N), local_dtype),   # local_feature (B, C, N)
            jax.ShapeDtypeStruct((B, C2, 1), jnp.float32),   # per-batch max over points
        ),
        grid=(B, num_n_tiles),
        in_specs=[
            pl.BlockSpec((1, 4, tile_n), lambda b, n: (b, 0, n)),   # xyz + ones channel
            pl.BlockSpec((1, C0, 4), lambda b, n: (b, 0, 0)),       # folded layer-0 weight
            resident(w1b), resident(b1c),
            resident(w2b), resident(b2c),
        ],
        out_specs=(
            pl.BlockSpec((1, C2, tile_n), lambda b, n: (b, 0, n)),
            pl.BlockSpec((1, C2, 1), lambda b, n: (b, 0, 0)),       # resident max output
        ),
        scratch_shapes=[pltpu.VMEM((C2, 128), jnp.float32)],        # running max (VPU path)
        compiler_params=pltpu.CompilerParams(
            # TODO(synk): on v7x with B == 1 (or odd B) split the N axis across the
            # two TensorCores instead; B-parallel leaves one core idle there.
            dimension_semantics=("parallel", "arbitrary"),
            vmem_limit_bytes=48 * 1024 * 1024,
        ),
    )(x4, w0_eff, w1b, b1c, w2b, b2c)

    # ---- tiny global MLP as one batched XLA GEMM (f32) --------------------------
    g = gmax[:, :, 0].astype(jnp.float32)                  # (B, C2)
    g = jax.nn.leaky_relu(g @ wm0.T + bm0, NEG_SLOPE)
    g = g @ wm1.T + bm1                                    # (B, pc_feature_dim)
    return g, local


def make_params(key,
                point_feature_dim=3,
                local_dims=(64, 128, 256),
                global_dims=(256,),
                pc_feature_dim=128):
    """Deterministic synthetic parameters in PyTorch layout: weights (out, in), biases (out,)."""
    keys = jax.random.split(key, 16)
    params = []
    dims = [point_feature_dim] + list(local_dims)
    ki = 0
    for i in range(len(local_dims)):
        fan_in, fan_out = dims[i], dims[i + 1]
        std = (2.0 / (fan_in + fan_out)) ** 0.5
        w = std * jax.random.normal(keys[ki], (fan_out, fan_in), jnp.float32); ki += 1
        b = 0.01 * jax.random.uniform(keys[ki], (fan_out,), jnp.float32, -1.0, 1.0); ki += 1
        params += [w, b]
    mdims = [local_dims[-1]] + list(global_dims) + [pc_feature_dim]
    for i in range(len(mdims) - 1):
        fan_in, fan_out = mdims[i], mdims[i + 1]
        std = (2.0 / (fan_in + fan_out)) ** 0.5
        w = std * jax.random.normal(keys[ki], (fan_out, fan_in), jnp.float32); ki += 1
        b = 0.01 * jax.random.uniform(keys[ki], (fan_out,), jnp.float32, -1.0, 1.0); ki += 1
        params += [w, b]
    return tuple(params)


def reference_forward(x, rot, trans, params):
    """Pure-JAX f32 reference mirroring the PyTorch module exactly."""
    w0, b0, w1, b1, w2, b2, wm0, bm0, wm1, bm1 = params
    xyz = x[..., :3] - trans[:, None, :]
    xyz = jnp.einsum('nba,nkb->nka', rot, xyz)
    p = xyz * 10.0                                # x[..., :point_feature_dim] * 10
    h = jax.nn.leaky_relu(p @ w0.T + b0, NEG_SLOPE)
    h = jax.nn.leaky_relu(h @ w1.T + b1, NEG_SLOPE)
    h = jax.nn.leaky_relu(h @ w2.T + b2, NEG_SLOPE)
    local = jnp.transpose(h, (0, 2, 1))           # (B, C, N)
    g = jnp.max(h, axis=1)                        # (B, C)
    g = jax.nn.leaky_relu(g @ wm0.T + bm0, NEG_SLOPE)
    g = g @ wm1.T + bm1
    return g, local


def _max_rel_err(a, b):
    return float(jnp.max(jnp.abs(a - b)) / (jnp.max(jnp.abs(b)) + 1e-9))


if __name__ == "__main__":
    key = jax.random.PRNGKey(0)
    kx, kp = jax.random.split(key, 2)
    params = make_params(kp)

    def run_case(B, N, K, max_tile_n):
        kxx, krr, ktt = jax.random.split(jax.random.fold_in(kx, N), 3)
        x = jax.random.normal(kxx, (B, N, K), jnp.float32)
        rot = (jnp.eye(3, dtype=jnp.float32)[None]
               + 0.1 * jax.random.normal(krr, (B, 3, 3), jnp.float32))
        trans = jax.random.normal(ktt, (B, 3), jnp.float32)

        gfeat, local = jax.block_until_ready(
            rel_pointnet_forward(x, rot, trans, params, max_tile_n=max_tile_n))
        gref, lref = reference_forward(x, rot, trans, params)

        assert gfeat.shape == (B, 128) and local.shape == (B, 256, N)
        # bf16 MXU operands => compare at bf16-level tolerance against the f32 reference.
        le = _max_rel_err(local, lref)
        ge = _max_rel_err(gfeat, gref)
        assert le < 5e-2, f"local_feature rel err {le}"
        assert ge < 5e-2, f"global_feature rel err {ge}"

    # Case 1: single N tile (tile_n == N).
    run_case(B=2, N=128, K=6, max_tile_n=2048)
    # Case 2: multi-tile + padded tail (N > max_tile_n, N % tile_n != 0) exercises the
    # resident-max scratch, the pl.when-gated tail mask and partial-block output clipping.
    run_case(B=2, N=320, K=6, max_tile_n=128)

    print("KERNEL_OK")
</pallas_src>

<mosaic_0001>
module attributes {stable_mosaic.version = 11 : i64} {
  func.func @relpointnet_kernel(%arg0: i32, %arg1: i32, %arg2: memref<1x4x128xf32, #tpu.memory_space<vmem>>, %arg3: memref<1x64x4xf32, #tpu.memory_space<vmem>>, %arg4: memref<128x64xbf16, #tpu.memory_space<vmem>>, %arg5: memref<128x1xf32, #tpu.memory_space<vmem>>, %arg6: memref<256x128xbf16, #tpu.memory_space<vmem>>, %arg7: memref<256x1xf32, #tpu.memory_space<vmem>>, %arg8: memref<1x256x128xf32, #tpu.memory_space<vmem>>, %arg9: memref<1x256x1xf32, #tpu.memory_space<vmem>>, %arg10: memref<256x128xf32, #tpu.memory_space<vmem>>) attributes {dimension_semantics = [#tpu.dimension_semantics<parallel>, #tpu.dimension_semantics<arbitrary>], iteration_bounds = array<i64: 2, 1>, scalar_prefetch = 0 : i64, scratch_operands = 1 : i64, tpu.core_type = #tpu.core_type<tc>, window_params = [{transform_indices = @transform_0, window_bounds = array<i64: 1, 4, 128>}, {transform_indices = @transform_1, window_bounds = array<i64: 1, 64, 4>}, {pipeline_mode = #tpu.pipeline_mode<synchronous>, transform_indices = @transform_2, window_bounds = array<i64: 128, 64>}, {pipeline_mode = #tpu.pipeline_mode<synchronous>, transform_indices = @transform_3, window_bounds = array<i64: 128, 1>}, {pipeline_mode = #tpu.pipeline_mode<synchronous>, transform_indices = @transform_4, window_bounds = array<i64: 256, 128>}, {pipeline_mode = #tpu.pipeline_mode<synchronous>, transform_indices = @transform_5, window_bounds = array<i64: 256, 1>}, {transform_indices = @transform_6, window_bounds = array<i64: 1, 256, 128>}, {transform_indices = @transform_7, window_bounds = array<i64: 1, 256, 1>}]} {
    %c0 = arith.constant 0 : index
    %c0_0 = arith.constant 0 : index
    %c0_1 = arith.constant 0 : index
    %0 = vector.load %arg2[%c0, %c0_0, %c0_1] : memref<1x4x128xf32, #tpu.memory_space<vmem>>, vector<1x4x128xf32>
    %1 = vector.shape_cast %0 : vector<1x4x128xf32> to vector<4x128xf32>
    %c0_2 = arith.constant 0 : index
    %c0_3 = arith.constant 0 : index
    %c0_4 = arith.constant 0 : index
    %2 = vector.load %arg3[%c0_2, %c0_3, %c0_4] : memref<1x64x4xf32, #tpu.memory_space<vmem>>, vector<1x64x4xf32>
    %3 = vector.shape_cast %2 : vector<1x64x4xf32> to vector<64x4xf32>
    %4 = vector.extract_strided_slice %3 {offsets = [0, 0], sizes = [64, 1], strides = [1, 1]} : vector<64x4xf32> to vector<64x1xf32>
    %5 = vector.extract_strided_slice %1 {offsets = [0, 0], sizes = [1, 128], strides = [1, 1]} : vector<4x128xf32> to vector<1x128xf32>
    %6 = vector.broadcast %4 : vector<64x1xf32> to vector<64x128xf32>
    %7 = vector.broadcast %5 : vector<1x128xf32> to vector<64x128xf32>
    %8 = arith.mulf %6, %7 : vector<64x128xf32>
    %9 = vector.extract_strided_slice %3 {offsets = [0, 1], sizes = [64, 1], strides = [1, 1]} : vector<64x4xf32> to vector<64x1xf32>
    %10 = vector.extract_strided_slice %1 {offsets = [1, 0], sizes = [1, 128], strides = [1, 1]} : vector<4x128xf32> to vector<1x128xf32>
    %11 = vector.broadcast %9 : vector<64x1xf32> to vector<64x128xf32>
    %12 = vector.broadcast %10 : vector<1x128xf32> to vector<64x128xf32>
    %13 = arith.mulf %11, %12 : vector<64x128xf32>
    %14 = arith.addf %8, %13 : vector<64x128xf32>
    %15 = vector.extract_strided_slice %3 {offsets = [0, 2], sizes = [64, 1], strides = [1, 1]} : vector<64x4xf32> to vector<64x1xf32>
    %16 = vector.extract_strided_slice %1 {offsets = [2, 0], sizes = [1, 128], strides = [1, 1]} : vector<4x128xf32> to vector<1x128xf32>
    %17 = vector.broadcast %15 : vector<64x1xf32> to vector<64x128xf32>
    %18 = vector.broadcast %16 : vector<1x128xf32> to vector<64x128xf32>
    %19 = arith.mulf %17, %18 : vector<64x128xf32>
    %20 = arith.addf %14, %19 : vector<64x128xf32>
    %21 = vector.extract_strided_slice %3 {offsets = [0, 3], sizes = [64, 1], strides = [1, 1]} : vector<64x4xf32> to vector<64x1xf32>
    %22 = vector.extract_strided_slice %1 {offsets = [3, 0], sizes = [1, 128], strides = [1, 1]} : vector<4x128xf32> to vector<1x128xf32>
    %23 = vector.broadcast %21 : vector<64x1xf32> to vector<64x128xf32>
    %24 = vector.broadcast %22 : vector<1x128xf32> to vector<64x128xf32>
    %25 = arith.mulf %23, %24 : vector<64x128xf32>
    %26 = arith.addf %20, %25 : vector<64x128xf32>
    %cst = arith.constant 0.00999999977 : f32
    %27 = vector.broadcast %cst : f32 to vector<64x128xf32>
    %28 = arith.mulf %27, %26 : vector<64x128xf32>
    %29 = arith.maximumf %26, %28 : vector<64x128xf32>
    %c0_5 = arith.constant 0 : index
    %c0_6 = arith.constant 0 : index
    %30 = vector.load %arg4[%c0_5, %c0_6] : memref<128x64xbf16, #tpu.memory_space<vmem>>, vector<128x64xbf16>
    %31 = arith.truncf %29 : vector<64x128xf32> to vector<64x128xbf16>
    %cst_7 = arith.constant dense<0.000000e+00> : vector<128x128xf32>
    %32 = tpu.matmul %30, %31, %cst_7 {dimension_numbers = #tpu.dot_dimension_numbers<[1], [0], [0], [1], [0, 0, 1, 1], [], []>} : vector<128x64xbf16>, vector<64x128xbf16>, vector<128x128xf32> -> vector<128x128xf32>
    %c0_8 = arith.constant 0 : index
    %c0_9 = arith.constant 0 : index
    %33 = vector.load %arg5[%c0_8, %c0_9] : memref<128x1xf32, #tpu.memory_space<vmem>>, vector<128x1xf32>
    %34 = vector.broadcast %33 : vector<128x1xf32> to vector<128x128xf32>
    %35 = arith.addf %32, %34 : vector<128x128xf32>
    %cst_10 = arith.constant 0.00999999977 : f32
    %36 = vector.broadcast %cst_10 : f32 to vector<128x128xf32>
    %37 = arith.mulf %36, %35 : vector<128x128xf32>
    %38 = arith.maximumf %35, %37 : vector<128x128xf32>
    %c0_11 = arith.constant 0 : index
    %c0_12 = arith.constant 0 : index
    %39 = vector.load %arg6[%c0_11, %c0_12] : memref<256x128xbf16, #tpu.memory_space<vmem>>, vector<256x128xbf16>
    %40 = arith.truncf %38 : vector<128x128xf32> to vector<128x128xbf16>
    %cst_13 = arith.constant dense<0.000000e+00> : vector<256x128xf32>
    %41 = tpu.matmul %39, %40, %cst_13 {dimension_numbers = #tpu.dot_dimension_numbers<[1], [0], [0], [1], [0, 0, 1, 1], [], []>} : vector<256x128xbf16>, vector<128x128xbf16>, vector<256x128xf32> -> vector<256x128xf32>
    %c0_14 = arith.constant 0 : index
    %c0_15 = arith.constant 0 : index
    %42 = vector.load %arg7[%c0_14, %c0_15] : memref<256x1xf32, #tpu.memory_space<vmem>>, vector<256x1xf32>
    %43 = vector.broadcast %42 : vector<256x1xf32> to vector<256x128xf32>
    %44 = arith.addf %41, %43 : vector<256x128xf32>
    %cst_16 = arith.constant 0.00999999977 : f32
    %45 = vector.broadcast %cst_16 : f32 to vector<256x128xf32>
    %46 = arith.mulf %45, %44 : vector<256x128xf32>
    %47 = arith.maximumf %44, %46 : vector<256x128xf32>
    %c0_17 = arith.constant 0 : index
    %c0_18 = arith.constant 0 : index
    %c0_19 = arith.constant 0 : index
    %48 = vector.load %arg8[%c0_17, %c0_18, %c0_19] : memref<1x256x128xf32, #tpu.memory_space<vmem>>, vector<1x256x128xf32>
    %49 = vector.shape_cast %48 : vector<1x256x128xf32> to vector<256x128xf32>
    %50 = vector.shape_cast %47 : vector<256x128xf32> to vector<1x256x128xf32>
    tpu.vector_store %arg8[%c0_17, %c0_18, %c0_19], %50 {strides = array<i32>} : memref<1x256x128xf32, #tpu.memory_space<vmem>>, vector<1x256x128xf32>,
    %cst_20 = arith.constant dense<0xFF800000> : vector<256xf32>
    %51 = vector.multi_reduction <maximumf>, %47, %cst_20 [1] : vector<256x128xf32> to vector<256xf32>
    %52 = vector.shape_cast %51 : vector<256xf32> to vector<256x1xf32>
    %c0_21 = arith.constant 0 : index
    %c0_22 = arith.constant 0 : index
    %c0_23 = arith.constant 0 : index
    %53 = vector.load %arg9[%c0_21, %c0_22, %c0_23] : memref<1x256x1xf32, #tpu.memory_space<vmem>>, vector<1x256x1xf32>
    %54 = vector.shape_cast %53 : vector<1x256x1xf32> to vector<256x1xf32>
    %55 = vector.shape_cast %52 : vector<256x1xf32> to vector<1x256x1xf32>
    tpu.vector_store %arg9[%c0_21, %c0_22, %c0_23], %55 {strides = array<i32>} : memref<1x256x1xf32, #tpu.memory_space<vmem>>, vector<1x256x1xf32>,
    return
  }
  func.func @transform_0(%arg0: i32, %arg1: i32) -> (i32, i32, i32) {
    %c0_i32 = arith.constant 0 : i32
    %c0_i32_0 = arith.constant 0 : i32
    return %arg0, %c0_i32, %arg1 : i32, i32, i32
  }
  func.func @transform_1(%arg0: i32, %arg1: i32) -> (i32, i32, i32) {
    %c0_i32 = arith.constant 0 : i32
    %c0_i32_0 = arith.constant 0 : i32
    %c0_i32_1 = arith.constant 0 : i32
    return %arg0, %c0_i32, %c0_i32_0 : i32, i32, i32
  }
  func.func @transform_2(%arg0: i32, %arg1: i32) -> (i32, i32) {
    %c0_i32 = arith.constant 0 : i32
    %c0_i32_0 = arith.constant 0 : i32
    %c0_i32_1 = arith.constant 0 : i32
    return %c0_i32, %c0_i32_0 : i32, i32
  }
  func.func @transform_3(%arg0: i32, %arg1: i32) -> (i32, i32) {
    %c0_i32 = arith.constant 0 : i32
    %c0_i32_0 = arith.constant 0 : i32
    %c0_i32_1 = arith.constant 0 : i32
    return %c0_i32, %c0_i32_0 : i32, i32
  }
  func.func @transform_4(%arg0: i32, %arg1: i32) -> (i32, i32) {
    %c0_i32 = arith.constant 0 : i32
    %c0_i32_0 = arith.constant 0 : i32
    %c0_i32_1 = arith.constant 0 : i32
    return %c0_i32, %c0_i32_0 : i32, i32
  }
  func.func @transform_5(%arg0: i32, %arg1: i32) -> (i32, i32) {
    %c0_i32 = arith.constant 0 : i32
    %c0_i32_0 = arith.constant 0 : i32
    %c0_i32_1 = arith.constant 0 : i32
    return %c0_i32, %c0_i32_0 : i32, i32
  }
  func.func @transform_6(%arg0: i32, %arg1: i32) -> (i32, i32, i32) {
    %c0_i32 = arith.constant 0 : i32
    %c0_i32_0 = arith.constant 0 : i32
    return %arg0, %c0_i32, %arg1 : i32, i32, i32
  }
  func.func @transform_7(%arg0: i32, %arg1: i32) -> (i32, i32, i32) {
    %c0_i32 = arith.constant 0 : i32
    %c0_i32_0 = arith.constant 0 : i32
    %c0_i32_1 = arith.constant 0 : i32
    return %arg0, %c0_i32, %c0_i32_0 : i32, i32, i32
  }
}

</mosaic_0001>

<llo_original>
// kernel: tpu_custom_call.1
$region0: #{tpu_custom_call.1}
  #allocation0 [shape = 'u32[]', space=smem, size = 0x4, offset = 0x4, fixed_abs, tag = 'smem constant byte address 0x4 - core index']
  #allocation1 [shape = 'u32[144,128]{1,0:T(1,128)}', space=vmem, size = 0x12000, scoped, tag = 'internal scratch']
  #allocation2 [shape = 'f32[256,128]{1,0:T(8,128)}', space=vmem, size = 0x20000, scoped, tag = 'scratch operand']
  %s0 = inlined_call_operand.vmem [shape: f32[2,4,128], index: 0, kind: input, shape index: {}]
  %s1 = inlined_call_operand.vmem [shape: f32[2,64,4], index: 1, kind: input, shape index: {}]
  %s2 = inlined_call_operand.vmem [shape: bf16[128,64], index: 2, kind: input, shape index: {}]
  %s3 = inlined_call_operand.vmem [shape: f32[128,1], index: 3, kind: input, shape index: {}]
  %s4 = inlined_call_operand.vmem [shape: bf16[256,128], index: 4, kind: input, shape index: {}]
  %s5 = inlined_call_operand.vmem [shape: f32[256,1], index: 5, kind: input, shape index: {}]
  %s6 = inlined_call_operand.hbm [shape: f32[2,256,128], index: 6, kind: output, shape index: {0}]
  %s7 = inlined_call_operand.vmem [shape: f32[2,256,1], index: 7, kind: output, shape index: {1}]
  %8 = xla_tuple %s6, %s7
  %s9 = sld [smem:[#allocation0]]
  $region65: #{tpu_custom_call.1} parent=0
    _
  %s11 = ssub.s32 1, %s9
  %s12 = scalar_select 0, %s11, %s9
  $region1: #{tpu_custom_call.1} parent=0
    #allocation3 [shape = 'u8[262144]{0}', space=vmem, size = 0x40000, scoped, tag = 'output window, operand 0']
    #allocation4 [shape = 's32[2]{0}', space=sflag, size = 0x8, scoped, tag = 'scoped memory for tpu_custom_call.1']
    %13 = vsyncpa [#allocation4], 0
    %s14 = scalar_lea.sflag [#allocation4], 1
    %15 = vsyncpa %s14, 0
    loop: start=0, step=1, limit=4
    $region2: #{tpu_custom_call.1} parent=1 // loop_pre_header
      _
    $region3: #{tpu_custom_call.1} parent=1 // loop_header
      %s17 = sphi 0, %s21
      %p18 = scmp.ge.s32.totalorder %s17, 4
      %s24 = sphi 0, %s36
      %s25 = sphi 0, %s32
      %s26 = sphi 0, %s24
      %s27 = sphi 0, %s25
      %s28 = sphi 0, %s26
      %s29 = sphi 0, %s27
      %s41 = sphi 0, %s43
      %s44 = sphi 0, %s41
      %s45 = sphi 0, %s44
      %s61 = sphi 0, %s45
      %s67 = sphi 0, %s69
      %s70 = sphi 0, %s67
      %s71 = sphi 0, %s70
      %s87 = sphi 0, %s71
      %s91 = sphi 0, %s91
      %s93 = sphi 0, %s91
      %s94 = sphi 0, %s93
      %s108 = sphi 0, %s94
      %s112 = sphi 0, %s112
      %s114 = sphi 0, %s112
      %s115 = sphi 0, %s114
      %s129 = sphi 0, %s115
      %s133 = sphi 0, %s133
      %s135 = sphi 0, %s133
      %s136 = sphi 0, %s135
      %s150 = sphi 0, %s136
      %s154 = sphi 0, %s154
      %s156 = sphi 0, %s154
      %s157 = sphi 0, %s156
      %s171 = sphi 0, %s157
      %s179 = sphi 0, %s181
      %s182 = sphi 0, %s179
      %s183 = sphi 0, %s182
      %s199 = sphi 0, %s183
      %s205 = sphi 0, %s207
      %s208 = sphi 0, %s205
      %s209 = sphi 0, %s208
      %s225 = sphi 0, %s209
    $region4: #{tpu_custom_call.1} parent=1 // loop_header_branch
      %20 = sbr.rel (%p18) target = $region8
    $region5: #{tpu_custom_call.1} parent=1 // loop_body
      %s22 = ssub.s32 %s17, 1
      %s23 = ssub.s32 %s17, 2
      %s30 = sadd.s32 1, %s25
      %p31 = scmp.ge.s32.totalorder %s30, 1
      %s32 = scalar_select %p31, 0, %s30
      %s33 = sadd.s32 1, %s24
      %s34 = scalar_select %p31, %s33, %s24
      %p35 = scmp.ge.s32.totalorder %s34, 2
      %s36 = scalar_select %p35, 0, %s34
      %s37 = ssub.s32 %s24, %s36
      %s38 = ssub.s32 %s25, %s32
      %s39 = sor.u32 %s37, %s38
      %p40 = scmp.eq.s32.totalorder %s39, 0
      %s42 = sadd.s32 %s41, 1
      %s43 = scalar_select %p40, %s41, %s42
      %p46 = pneg %p40
      %p47 = scmp.eq.s32.totalorder %s17, 1
      %p48 = por %p46, %p47
      %p49 = scmp.ne.s32.totalorder %s41, %s44
      %p50 = scmp.eq.s32.totalorder %s17, 0
      %p51 = por %p49, %p50
      %p52 = scmp.ne.s32.totalorder %s41, %s44
      %p53 = scmp.eq.s32.totalorder %s22, 1
      %p54 = por %p52, %p53
      %p55 = scmp.ne.s32.totalorder %s44, %s45
      %p56 = scmp.eq.s32.totalorder %s22, 0
      %p57 = por %p55, %p56
      %p58 = scmp.ne.s32.totalorder %s44, %s45
      %p59 = scmp.eq.s32.totalorder %s23, 1
      %p60 = por %p58, %p59
      %p62 = scmp.ne.s32.totalorder %s45, %s61
      %p63 = scmp.eq.s32.totalorder %s23, 0
      %p64 = por %p62, %p63
      %s65 = ssub.s32 %s24, %s36
      %p66 = scmp.eq.s32.totalorder %s65, 0
      %s68 = sadd.s32 %s67, 1
      %s69 = scalar_select %p66, %s67, %s68
      %p72 = pneg %p66
      %p73 = scmp.eq.s32.totalorder %s17, 1
      %p74 = por %p72, %p73
      %p75 = scmp.ne.s32.totalorder %s67, %s70
      %p76 = scmp.eq.s32.totalorder %s17, 0
      %p77 = por %p75, %p76
      %p78 = scmp.ne.s32.totalorder %s67, %s70
      %p79 = scmp.eq.s32.totalorder %s22, 1
      %p80 = por %p78, %p79
      %p81 = scmp.ne.s32.totalorder %s70, %s71
      %p82 = scmp.eq.s32.totalorder %s22, 0
      %p83 = por %p81, %p82
      %p84 = scmp.ne.s32.totalorder %s70, %s71
      %p85 = scmp.eq.s32.totalorder %s23, 1
      %p86 = por %p84, %p85
      %p88 = scmp.ne.s32.totalorder %s71, %s87
      %p89 = scmp.eq.s32.totalorder %s23, 0
      %p90 = por %p88, %p89
      %s92 = sadd.s32 %s91, 1
      %p95 = scmp.eq.s32.totalorder %s17, 1
      %p96 = scmp.ne.s32.totalorder %s91, %s93
      %p97 = scmp.eq.s32.totalorder %s17, 0
      %p98 = por %p96, %p97
      %p99 = scmp.ne.s32.totalorder %s91, %s93
      %p100 = scmp.eq.s32.totalorder %s22, 1
      %p101 = por %p99, %p100
      %p102 = scmp.ne.s32.totalorder %s93, %s94
      %p103 = scmp.eq.s32.totalorder %s22, 0
      %p104 = por %p102, %p103
      %p105 = scmp.ne.s32.totalorder %s93, %s94
      %p106 = scmp.eq.s32.totalorder %s23, 1
      %p107 = por %p105, %p106
      %p109 = scmp.ne.s32.totalorder %s94, %s108
      %p110 = scmp.eq.s32.totalorder %s23, 0
      %p111 = por %p109, %p110
      %s113 = sadd.s32 %s112, 1
      %p116 = scmp.eq.s32.totalorder %s17, 1
      %p117 = scmp.ne.s32.totalorder %s112, %s114
      %p118 = scmp.eq.s32.totalorder %s17, 0
      %p119 = por %p117, %p118
      %p120 = scmp.ne.s32.totalorder %s112, %s114
      %p121 = scmp.eq.s32.totalorder %s22, 1
      %p122 = por %p120, %p121
      %p123 = scmp.ne.s32.totalorder %s114, %s115
      %p124 = scmp.eq.s32.totalorder %s22, 0
      %p125 = por %p123, %p124
      %p126 = scmp.ne.s32.totalorder %s114, %s115
      %p127 = scmp.eq.s32.totalorder %s23, 1
      %p128 = por %p126, %p127
      %p130 = scmp.ne.s32.totalorder %s115, %s129
      %p131 = scmp.eq.s32.totalorder %s23, 0
      %p132 = por %p130, %p131
      %s134 = sadd.s32 %s133, 1
      %p137 = scmp.eq.s32.totalorder %s17, 1
      %p138 = scmp.ne.s32.totalorder %s133, %s135
      %p139 = scmp.eq.s32.totalorder %s17, 0
      %p140 = por %p138, %p139
      %p141 = scmp.ne.s32.totalorder %s133, %s135
      %p142 = scmp.eq.s32.totalorder %s22, 1
      %p143 = por %p141, %p142
      %p144 = scmp.ne.s32.totalorder %s135, %s136
      %p145 = scmp.eq.s32.totalorder %s22, 0
      %p146 = por %p144, %p145
      %p147 = scmp.ne.s32.totalorder %s135, %s136
      %p148 = scmp.eq.s32.totalorder %s23, 1
      %p149 = por %p147, %p148
      %p151 = scmp.ne.s32.totalorder %s136, %s150
      %p152 = scmp.eq.s32.totalorder %s23, 0
      %p153 = por %p151, %p152
      %s155 = sadd.s32 %s154, 1
      %p158 = scmp.eq.s32.totalorder %s17, 1
      %p159 = scmp.ne.s32.totalorder %s154, %s156
      %p160 = scmp.eq.s32.totalorder %s17, 0
      %p161 = por %p159, %p160
      %p162 = scmp.ne.s32.totalorder %s154, %s156
      %p163 = scmp.eq.s32.totalorder %s22, 1
      %p164 = por %p162, %p163
      %p165 = scmp.ne.s32.totalorder %s156, %s157
      %p166 = scmp.eq.s32.totalorder %s22, 0
      %p167 = por %p165, %p166
      %p168 = scmp.ne.s32.totalorder %s156, %s157
      %p169 = scmp.eq.s32.totalorder %s23, 1
      %p170 = por %p168, %p169
      %p172 = scmp.ne.s32.totalorder %s157, %s171
      %p173 = scmp.eq.s32.totalorder %s23, 0
      %p174 = por %p172, %p173
      %s175 = ssub.s32 %s24, %s36
      %s176 = ssub.s32 %s25, %s32
      %s177 = sor.u32 %s175, %s176
      %p178 = scmp.eq.s32.totalorder %s177, 0
      %s180 = sadd.s32 %s179, 1
      %s181 = scalar_select %p178, %s179, %s180
      %p184 = pneg %p178
      %p185 = scmp.eq.s32.totalorder %s17, 1
      %p186 = por %p184, %p185
      %p187 = scmp.ne.s32.totalorder %s179, %s182
      %p188 = scmp.eq.s32.totalorder %s17, 0
      %p189 = por %p187, %p188
      %p190 = scmp.ne.s32.totalorder %s179, %s182
      %p191 = scmp.eq.s32.totalorder %s22, 1
      %p192 = por %p190, %p191
      %p193 = scmp.ne.s32.totalorder %s182, %s183
      %p194 = scmp.eq.s32.totalorder %s22, 0
      %p195 = por %p193, %p194
      %p196 = scmp.ne.s32.totalorder %s182, %s183
      %p197 = scmp.eq.s32.totalorder %s23, 1
      %p198 = por %p196, %p197
      %p200 = scmp.ne.s32.totalorder %s183, %s199
      %p201 = scmp.eq.s32.totalorder %s23, 0
      %p202 = por %p200, %p201
      %s203 = ssub.s32 %s24, %s36
      %p204 = scmp.eq.s32.totalorder %s203, 0
      %s206 = sadd.s32 %s205, 1
      %s207 = scalar_select %p204, %s205, %s206
      %p210 = pneg %p204
      %p211 = scmp.eq.s32.totalorder %s17, 1
      %p212 = por %p210, %p211
      %p213 = scmp.ne.s32.totalorder %s205, %s208
      %p214 = scmp.eq.s32.totalorder %s17, 0
      %p215 = por %p213, %p214
      %p216 = scmp.ne.s32.totalorder %s205, %s208
      %p217 = scmp.eq.s32.totalorder %s22, 1
      %p218 = por %p216, %p217
      %p219 = scmp.ne.s32.totalorder %s208, %s209
      %p220 = scmp.eq.s32.totalorder %s22, 0
      %p221 = por %p219, %p220
      %p222 = scmp.ne.s32.totalorder %s208, %s209
      %p223 = scmp.eq.s32.totalorder %s23, 1
      %p224 = por %p222, %p223
      %p226 = scmp.ne.s32.totalorder %s209, %s225
      %p227 = scmp.eq.s32.totalorder %s23, 0
      %p228 = por %p226, %p227
      %p229 = scmp.le.s32.totalorder 1, %s17
      %p230 = scmp.lt.s32.totalorder %s17, 3
      %p231 = pnand %p229, %p230
      %p232 = pneg %p231
      // Predicated region
      $region9: #{tpu_custom_call.1} parent=5 // pred_check
        _
      $region10: #{tpu_custom_call.1} parent=5 // pred_check_branch
        %234 = sbr.rel (%p231) target = $region12
      $region11: #{tpu_custom_call.1} parent=5 // pred_region
        %s235 = ssub.s32 %s17, 1
        // Predicated region
        $region13: #{tpu_custom_call.1} parent=11 // pred_check
          %p236 = pneg %p104
        $region14: #{tpu_custom_call.1} parent=11 // pred_check_branch
          %238 = sbr.rel (%p236) target = $region16
        $region15: #{tpu_custom_call.1} parent=11 // pred_region
          _
        $region16: #{tpu_custom_call.1} parent=11 // pred_fallthru
          _
        // Predicated region
        $region17: #{tpu_custom_call.1} parent=11 // pred_check
          %p239 = pneg %p125
        $region18: #{tpu_custom_call.1} parent=11 // pred_check_branch
          %241 = sbr.rel (%p239) target = $region20
        $region19: #{tpu_custom_call.1} parent=11 // pred_region
          _
        $region20: #{tpu_custom_call.1} parent=11 // pred_fallthru
          _
        // Predicated region
        $region21: #{tpu_custom_call.1} parent=11 // pred_check
          %p242 = pneg %p146
        $region22: #{tpu_custom_call.1} parent=11 // pred_check_branch
          %244 = sbr.rel (%p242) target = $region24
        $region23: #{tpu_custom_call.1} parent=11 // pred_region
          _
        $region24: #{tpu_custom_call.1} parent=11 // pred_fallthru
          _
        // Predicated region
        $region25: #{tpu_custom_call.1} parent=11 // pred_check
          %p245 = pneg %p167
        $region26: #{tpu_custom_call.1} parent=11 // pred_check_branch
          %247 = sbr.rel (%p245) target = $region28
        $region27: #{tpu_custom_call.1} parent=11 // pred_region
          _
        $region28: #{tpu_custom_call.1} parent=11 // pred_fallthru
          _
      $region12: #{tpu_custom_call.1} parent=5 // pred_fallthru
        _
      %p248 = scmp.lt.s32.totalorder %s17, 2
      // Predicated region
      $region29: #{tpu_custom_call.1} parent=5 // pred_check
        %p249 = pneg %p248
      $region30: #{tpu_custom_call.1} parent=5 // pred_check_branch
        %251 = sbr.rel (%p249) target = $region32
      $region31: #{tpu_custom_call.1} parent=5 // pred_region
        // Predicated region
        $region33: #{tpu_custom_call.1} parent=31 // pred_check
          %p252 = pneg %p51
        $region34: #{tpu_custom_call.1} parent=31 // pred_check_branch
          %254 = sbr.rel (%p252) target = $region36
        $region35: #{tpu_custom_call.1} parent=31 // pred_region
          %p255 = scmp.lt.s32.totalorder %s24, 1
          %s256 = scalar_select %p255, %s24, 1
          %p257 = scmp.lt.s32.totalorder %s25, 0
          %s258 = scalar_select %p257, %s25, 0
          %s259 = sadd.s32 %s258, %s256
          %s260 = smul.addr %s259, 4
          %s261 = scalar_lea.vmem %s0, %s260
        $region36: #{tpu_custom_call.1} parent=31 // pred_fallthru
          _
        // Predicated region
        $region37: #{tpu_custom_call.1} parent=31 // pred_check
          %p262 = pneg %p77
        $region38: #{tpu_custom_call.1} parent=31 // pred_check_branch
          %264 = sbr.rel (%p262) target = $region40
        $region39: #{tpu_custom_call.1} parent=31 // pred_region
          %p265 = scmp.lt.s32.totalorder %s24, 1
          %s266 = scalar_select %p265, %s24, 1
          %s267 = smul.addr %s266, 8
          %s268 = smul.addr %s267, 8
          %s269 = scalar_lea.vmem %s1, %s268
        $region40: #{tpu_custom_call.1} parent=31 // pred_fallthru
          _
      $region32: #{tpu_custom_call.1} parent=5 // pred_fallthru
        _
      %p270 = scmp.le.s32.totalorder 1, %s17
      %p271 = scmp.lt.s32.totalorder %s17, 3
      %p272 = pnand %p270, %p271
      %p273 = pneg %p272
      // Predicated region
      $region41: #{tpu_custom_call.1} parent=5 // pred_check
        _
      $region42: #{tpu_custom_call.1} parent=5 // pred_check_branch
        %275 = sbr.rel (%p272) target = $region44
      $region43: #{tpu_custom_call.1} parent=5 // pred_region
        %s276 = ssub.s32 %s17, 1
        %p277 = scmp.lt.s32.totalorder %s26, 1
        %s278 = scalar_select %p277, %s26, 1
        %p279 = scmp.lt.s32.totalorder %s27, 0
        %s280 = scalar_select %p279, %s27, 0
        %s281 = sadd.s32 %s280, %s278
        %s282 = smul.addr %s281, 4
        %s283 = scalar_lea.vmem %s0, %s282
        %p284 = pneg %p57
        %p285 = pneg %p54
        %p286 = scmp.lt.s32.totalorder %s26, 1
        %s287 = scalar_select %p286, %s26, 1
        %s288 = smul.addr %s287, 8
        %s289 = smul.addr %s288, 8
        %s290 = scalar_lea.vmem %s1, %s289
        %p291 = pneg %p83
        %p292 = pneg %p80
        %p293 = pneg %p104
        %p294 = pneg %p101
        %p295 = pneg %p125
        %p296 = pneg %p122
        %p297 = pneg %p146
        %p298 = pneg %p143
        %p299 = pneg %p167
        %p300 = pneg %p164
        %p301 = pneg %p195
        %p302 = pneg %p192
        %s303 = sand.u32 %s182, 1
        %s304 = scalar_lea.sflag [#allocation4], %s303
        %s305 = sand.u32 %s182, 1
        %s306 = smul.addr %s305, 256
        %s307 = scalar_lea.vmem [#allocation3], %s306
        %p308 = pneg %p221
        %p309 = pneg %p218
        %p310 = scmp.lt.s32.totalorder %s26, 1
        %s311 = scalar_select %p310, %s26, 1
        %s312 = smul.addr %s311, 32
        %s313 = smul.addr %s312, 8
        %s314 = scalar_lea.vmem %s7, %s313
        %p315 = scmp.lt.s32.totalorder %s26, 1
        %s316 = scalar_select %p315, %s26, 1
        %p317 = scmp.lt.s32.totalorder %s27, 0
        %s318 = scalar_select %p317, %s27, 0
        %s319 = sadd.s32 %s318, %s316
        %s320 = smul.addr %s319, 4
        %s321 = scalar_lea.vmem %s0, %s320
        %p322 = scmp.lt.s32.totalorder %s26, 1
        %s323 = scalar_select %p322, %s26, 1
        %s324 = smul.addr %s323, 8
        %s325 = smul.addr %s324, 8
        %s326 = scalar_lea.vmem %s1, %s325
        %p327 = scmp.lt.s32.totalorder %s26, 1
        %s328 = scalar_select %p327, %s26, 1
        %s329 = smul.addr %s328, 32
        %s330 = smul.addr %s329, 8
        %s331 = scalar_lea.vmem %s7, %s330
        %v333 = vld [vmem:[%s321] sm:$0xf]
        %v334 = vld [vmem:[%s326] sm:$0xff]
        %v335 = vld [vmem:[%s326 + $0x8] sm:$0xff]
        %v336 = vld [vmem:[%s326 + $0x10] sm:$0xff]
        %v337 = vld [vmem:[%s326 + $0x18] sm:$0xff]
        %v338 = vld [vmem:[%s326 + $0x20] sm:$0xff]
        %v339 = vld [vmem:[%s326 + $0x28] sm:$0xff]
        %v340 = vld [vmem:[%s326 + $0x30] sm:$0xff]
        %v341 = vld [vmem:[%s326 + $0x38] sm:$0xff]
        %343 = vset.pattern.permute.xlu0 0
        %344 = vperm.xlu0 %343, %v334
        %v345 = vpop.permute.xlu0 %344
        %348 = vset.pattern.permute.xlu0 0
        %349 = vperm.xlu0 %348, %v335
        %v350 = vpop.permute.xlu0 %349
        %353 = vset.pattern.permute.xlu0 0
        %354 = vperm.xlu0 %353, %v336
        %v355 = vpop.permute.xlu0 %354
        %358 = vset.pattern.permute.xlu0 0
        %359 = vperm.xlu0 %358, %v337
        %v360 = vpop.permute.xlu0 %359
        %363 = vset.pattern.permute.xlu0 0
        %364 = vperm.xlu0 %363, %v338
        %v365 = vpop.permute.xlu0 %364
        %368 = vset.pattern.permute.xlu0 0
        %369 = vperm.xlu0 %368, %v339
        %v370 = vpop.permute.xlu0 %369
        %373 = vset.pattern.permute.xlu0 0
        %374 = vperm.xlu0 %373, %v340
        %v375 = vpop.permute.xlu0 %374
        %378 = vset.pattern.permute.xlu0 0
        %379 = vperm.xlu0 %378, %v341
        %v380 = vpop.permute.xlu0 %379
        %v382 = vlaneseq
        %v383 = vshrl.u32 %v382, 7
        %v384 = vsub.s32 0, %v383
        %v385 = vrot.slane %v333, %v384
        %v386 = vmul.f32 %v345, %v385
        %v387 = vmul.f32 %v350, %v385
        %v388 = vmul.f32 %v355, %v385
        %v389 = vmul.f32 %v360, %v385
        %v390 = vmul.f32 %v365, %v385
        %v391 = vmul.f32 %v370, %v385
        %v392 = vmul.f32 %v375, %v385
        %v393 = vmul.f32 %v380, %v385
        %394 = vset.pattern.permute.xlu0 1
        %395 = vperm.xlu0 %394, %v334
        %v396 = vpop.permute.xlu0 %395
        %398 = vset.pattern.permute.xlu0 1
        %399 = vperm.xlu0 %398, %v335
        %v400 = vpop.permute.xlu0 %399
        %402 = vset.pattern.permute.xlu0 1
        %403 = vperm.xlu0 %402, %v336
        %v404 = vpop.permute.xlu0 %403
        %406 = vset.pattern.permute.xlu0 1
        %407 = vperm.xlu0 %406, %v337
        %v408 = vpop.permute.xlu0 %407
        %410 = vset.pattern.permute.xlu0 1
        %411 = vperm.xlu0 %410, %v338
        %v412 = vpop.permute.xlu0 %411
        %414 = vset.pattern.permute.xlu0 1
        %415 = vperm.xlu0 %414, %v339
        %v416 = vpop.permute.xlu0 %415
        %418 = vset.pattern.permute.xlu0 1
        %419 = vperm.xlu0 %418, %v340
        %v420 = vpop.permute.xlu0 %419
        %422 = vset.pattern.permute.xlu0 1
        %423 = vperm.xlu0 %422, %v341
        %v424 = vpop.permute.xlu0 %423
        %v426 = vlaneseq
        %v427 = vshrl.u32 %v426, 7
        %v428 = vsub.s32 1, %v427
        %v429 = vrot.slane %v333, %v428
        %v430 = vmul.f32 %v396, %v429
        %v431 = vmul.f32 %v400, %v429
        %v432 = vmul.f32 %v404, %v429
        %v433 = vmul.f32 %v408, %v429
        %v434 = vmul.f32 %v412, %v429
        %v435 = vmul.f32 %v416, %v429
        %v436 = vmul.f32 %v420, %v429
        %v437 = vmul.f32 %v424, %v429
        %v438 = vadd.f32 %v386, %v430
        %v439 = vadd.f32 %v387, %v431
        %v440 = vadd.f32 %v388, %v432
        %v441 = vadd.f32 %v389, %v433
        %v442 = vadd.f32 %v390, %v434
        %v443 = vadd.f32 %v391, %v435
        %v444 = vadd.f32 %v392, %v436
        %v445 = vadd.f32 %v393, %v437
        %446 = vset.pattern.permute.xlu0 2
        %447 = vperm.xlu0 %446, %v334
        %v448 = vpop.permute.xlu0 %447
        %450 = vset.pattern.permute.xlu0 2
        %451 = vperm.xlu0 %450, %v335
        %v452 = vpop.permute.xlu0 %451
        %454 = vset.pattern.permute.xlu0 2
        %455 = vperm.xlu0 %454, %v336
        %v456 = vpop.permute.xlu0 %455
        %458 = vset.pattern.permute.xlu0 2
        %459 = vperm.xlu0 %458, %v337
        %v460 = vpop.permute.xlu0 %459
        %462 = vset.pattern.permute.xlu0 2
        %463 = vperm.xlu0 %462, %v338
        %v464 = vpop.permute.xlu0 %463
        %466 = vset.pattern.permute.xlu0 2
        %467 = vperm.xlu0 %466, %v339
        %v468 = vpop.permute.xlu0 %467
        %470 = vset.pattern.permute.xlu0 2
        %471 = vperm.xlu0 %470, %v340
        %v472 = vpop.permute.xlu0 %471
        %474 = vset.pattern.permute.xlu0 2
        %475 = vperm.xlu0 %474, %v341
        %v476 = vpop.permute.xlu0 %475
        %v478 = vlaneseq
        %v479 = vshrl.u32 %v478, 7
        %v480 = vsub.s32 2, %v479
        %v481 = vrot.slane %v333, %v480
        %v482 = vmul.f32 %v448, %v481
        %v483 = vmul.f32 %v452, %v481
        %v484 = vmul.f32 %v456, %v481
        %v485 = vmul.f32 %v460, %v481
        %v486 = vmul.f32 %v464, %v481
        %v487 = vmul.f32 %v468, %v481
        %v488 = vmul.f32 %v472, %v481
        %v489 = vmul.f32 %v476, %v481
        %v490 = vadd.f32 %v438, %v482
        %v491 = vadd.f32 %v439, %v483
        %v492 = vadd.f32 %v440, %v484
        %v493 = vadd.f32 %v441, %v485
        %v494 = vadd.f32 %v442, %v486
        %v495 = vadd.f32 %v443, %v487
        %v496 = vadd.f32 %v444, %v488
        %v497 = vadd.f32 %v445, %v489
        %498 = vset.pattern.permute.xlu0 3
        %499 = vperm.xlu0 %498, %v334
        %v500 = vpop.permute.xlu0 %499
        %502 = vset.pattern.permute.xlu0 3
        %503 = vperm.xlu0 %502, %v335
        %v504 = vpop.permute.xlu0 %503
        %506 = vset.pattern.permute.xlu0 3
        %507 = vperm.xlu0 %506, %v336
        %v508 = vpop.permute.xlu0 %507
        %510 = vset.pattern.permute.xlu0 3
        %511 = vperm.xlu0 %510, %v337
        %v512 = vpop.permute.xlu0 %511
        %514 = vset.pattern.permute.xlu0 3
        %515 = vperm.xlu0 %514, %v338
        %v516 = vpop.permute.xlu0 %515
        %518 = vset.pattern.permute.xlu0 3
        %519 = vperm.xlu0 %518, %v339
        %v520 = vpop.permute.xlu0 %519
        %522 = vset.pattern.permute.xlu0 3
        %523 = vperm.xlu0 %522, %v340
        %v524 = vpop.permute.xlu0 %523
        %526 = vset.pattern.permute.xlu0 3
        %527 = vperm.xlu0 %526, %v341
        %v528 = vpop.permute.xlu0 %527
        %v530 = vlaneseq
        %v531 = vshrl.u32 %v530, 7
        %v532 = vsub.s32 3, %v531
        %v533 = vrot.slane %v333, %v532
        %v534 = vmul.f32 %v500, %v533
        %v535 = vmul.f32 %v504, %v533
        %v536 = vmul.f32 %v508, %v533
        %v537 = vmul.f32 %v512, %v533
        %v538 = vmul.f32 %v516, %v533
        %v539 = vmul.f32 %v520, %v533
        %v540 = vmul.f32 %v524, %v533
        %v541 = vmul.f32 %v528, %v533
        %v542 = vadd.f32 %v490, %v534
        %v543 = vadd.f32 %v491, %v535
        %v544 = vadd.f32 %v492, %v536
        %v545 = vadd.f32 %v493, %v537
        %v546 = vadd.f32 %v494, %v538
        %v547 = vadd.f32 %v495, %v539
        %v548 = vadd.f32 %v496, %v540
        %v549 = vadd.f32 %v497, %v541
        %v550 = vmul.f32 %v542, 0.01
        %v551 = vmul.f32 %v543, 0.01
        %v552 = vmul.f32 %v544, 0.01
        %v553 = vmul.f32 %v545, 0.01
        %v554 = vmul.f32 %v546, 0.01
        %v555 = vmul.f32 %v547, 0.01
        %v556 = vmul.f32 %v548, 0.01
        %v557 = vmul.f32 %v549, 0.01
        %v558 = vmax.f32 %v542, %v550
        %v559 = vmax.f32 %v543, %v551
        %v560 = vmax.f32 %v544, %v552
        %v561 = vmax.f32 %v545, %v553
        %v562 = vmax.f32 %v546, %v554
        %v563 = vmax.f32 %v547, %v555
        %v564 = vmax.f32 %v548, %v556
        %v565 = vmax.f32 %v549, %v557
        %v566 = vld [vmem:[%s2] sm:$0xf]
        %v567 = vld [vmem:[%s2 + $0x4] sm:$0xf]
        %v568 = vld [vmem:[%s2 + $0x8] sm:$0xf]
        %v569 = vld [vmem:[%s2 + $0xc] sm:$0xf]
        %v570 = vld [vmem:[%s2 + $0x10] sm:$0xf]
        %v571 = vld [vmem:[%s2 + $0x14] sm:$0xf]
        %v572 = vld [vmem:[%s2 + $0x18] sm:$0xf]
        %v573 = vld [vmem:[%s2 + $0x1c] sm:$0xf]
        %v574 = vld [vmem:[%s2 + $0x20] sm:$0xf]
        %v575 = vld [vmem:[%s2 + $0x24] sm:$0xf]
        %v576 = vld [vmem:[%s2 + $0x28] sm:$0xf]
        %v577 = vld [vmem:[%s2 + $0x2c] sm:$0xf]
        %v578 = vld [vmem:[%s2 + $0x30] sm:$0xf]
        %v579 = vld [vmem:[%s2 + $0x34] sm:$0xf]
        %v580 = vld [vmem:[%s2 + $0x38] sm:$0xf]
        %v581 = vld [vmem:[%s2 + $0x3c] sm:$0xf]
        %v582 = vpack.c.bf16 %v559, %v558
        %v583 = vpack.c.bf16 %v561, %v560
        %v584 = vpack.c.bf16 %v563, %v562
        %v585 = vpack.c.bf16 %v565, %v564
        %v586 = vld [vmem:[%s3] sm:$0xff]
        %v587 = vld [vmem:[%s3 + $0x8] sm:$0xff]
        %v588 = vld [vmem:[%s3 + $0x10] sm:$0xff]
        %v589 = vld [vmem:[%s3 + $0x18] sm:$0xff]
        %v590 = vld [vmem:[%s3 + $0x20] sm:$0xff]
        %v591 = vld [vmem:[%s3 + $0x28] sm:$0xff]
        %v592 = vld [vmem:[%s3 + $0x30] sm:$0xff]
        %v593 = vld [vmem:[%s3 + $0x38] sm:$0xff]
        %v594 = vld [vmem:[%s3 + $0x40] sm:$0xff]
        %v595 = vld [vmem:[%s3 + $0x48] sm:$0xff]
        %v596 = vld [vmem:[%s3 + $0x50] sm:$0xff]
        %v597 = vld [vmem:[%s3 + $0x58] sm:$0xff]
        %v598 = vld [vmem:[%s3 + $0x60] sm:$0xff]
        %v599 = vld [vmem:[%s3 + $0x68] sm:$0xff]
        %v600 = vld [vmem:[%s3 + $0x70] sm:$0xff]
        %v601 = vld [vmem:[%s3 + $0x78] sm:$0xff]
        %603 = vset.pattern.permute.xlu0 0
        %604 = vperm.xlu0 %603, %v586
        %v605 = vpop.permute.xlu0 %604
        %608 = vset.pattern.permute.xlu0 0
        %609 = vperm.xlu0 %608, %v587
        %v610 = vpop.permute.xlu0 %609
        %613 = vset.pattern.permute.xlu0 0
        %614 = vperm.xlu0 %613, %v588
        %v615 = vpop.permute.xlu0 %614
        %618 = vset.pattern.permute.xlu0 0
        %619 = vperm.xlu0 %618, %v589
        %v620 = vpop.permute.xlu0 %619
        %623 = vset.pattern.permute.xlu0 0
        %624 = vperm.xlu0 %623, %v590
        %v625 = vpop.permute.xlu0 %624
        %628 = vset.pattern.permute.xlu0 0
        %629 = vperm.xlu0 %628, %v591
        %v630 = vpop.permute.xlu0 %629
        %633 = vset.pattern.permute.xlu0 0
        %634 = vperm.xlu0 %633, %v592
        %v635 = vpop.permute.xlu0 %634
        %638 = vset.pattern.permute.xlu0 0
        %639 = vperm.xlu0 %638, %v593
        %v640 = vpop.permute.xlu0 %639
        %643 = vset.pattern.permute.xlu0 0
        %644 = vperm.xlu0 %643, %v594
        %v645 = vpop.permute.xlu0 %644
        %648 = vset.pattern.permute.xlu0 0
        %649 = vperm.xlu0 %648, %v595
        %v650 = vpop.permute.xlu0 %649
        %653 = vset.pattern.permute.xlu0 0
        %654 = vperm.xlu0 %653, %v596
        %v655 = vpop.permute.xlu0 %654
        %658 = vset.pattern.permute.xlu0 0
        %659 = vperm.xlu0 %658, %v597
        %v660 = vpop.permute.xlu0 %659
        %663 = vset.pattern.permute.xlu0 0
        %664 = vperm.xlu0 %663, %v598
        %v665 = vpop.permute.xlu0 %664
        %668 = vset.pattern.permute.xlu0 0
        %669 = vperm.xlu0 %668, %v599
        %v670 = vpop.permute.xlu0 %669
        %673 = vset.pattern.permute.xlu0 0
        %674 = vperm.xlu0 %673, %v600
        %v675 = vpop.permute.xlu0 %674
        %678 = vset.pattern.permute.xlu0 0
        %679 = vperm.xlu0 %678, %v601
        %v680 = vpop.permute.xlu0 %679
        %v698 = vunpack.c.l.b16 %v566
        %v699 = vunpack.c.l.b16 %v567
        %v700 = vunpack.c.l.b16 %v568
        %v701 = vunpack.c.l.b16 %v569
        %v702 = vunpack.c.l.b16 %v570
        %v703 = vunpack.c.l.b16 %v571
        %v704 = vunpack.c.l.b16 %v572
        %v705 = vunpack.c.l.b16 %v573
        %v706 = vunpack.c.l.b16 %v574
        %v707 = vunpack.c.l.b16 %v575
        %v708 = vunpack.c.l.b16 %v576
        %v709 = vunpack.c.l.b16 %v577
        %v710 = vunpack.c.l.b16 %v578
        %v711 = vunpack.c.l.b16 %v579
        %v712 = vunpack.c.l.b16 %v580
        %v713 = vunpack.c.l.b16 %v581
        %v714 = vpack.c.b16 %v699, %v698
        %v715 = vpack.c.b16 %v701, %v700
        %v716 = vpack.c.b16 %v703, %v702
        %v717 = vpack.c.b16 %v705, %v704
        %v718 = vpack.c.b16 %v707, %v706
        %v719 = vpack.c.b16 %v709, %v708
        %v720 = vpack.c.b16 %v711, %v710
        %v721 = vpack.c.b16 %v713, %v712
        %vm722 = vcmask 523264
        %v724 = vsel %vm722, %v714, 0
        %v727 = vsel %vm722, %v715, 0
        %v730 = vsel %vm722, %v716, 0
        %v733 = vsel %vm722, %v717, 0
        %v736 = vsel %vm722, %v718, 0
        %v739 = vsel %vm722, %v719, 0
        %v742 = vsel %vm722, %v720, 0
        %v745 = vsel %vm722, %v721, 0
        %747 = vmatprep.subr.bf16.mxu0 0
        %748 = vmatpush1.bf16.msra.mxu0 %v582
        %749 = vmatprep.subr.bf16.mxu0 0
        %750 = vmatpush1.bf16.msra.mxu0 %v583
        %751 = vmatprep.subr.bf16.mxu0 0
        %752 = vmatpush1.bf16.msra.mxu0 %v584
        %753 = vmatprep.subr.bf16.mxu0 0
        %754 = vmatpush1.bf16.msra.mxu0 %v585
        %755 = vmatprep.subr.bf16.mxu0 0
        %756 = vmatpush1.bf16.msra.mxu0 0
        %757 = vmatprep.subr.bf16.mxu0 0
        %758 = vmatpush1.bf16.msra.mxu0 0
        %759 = vmatprep.subr.bf16.mxu0 0
        %760 = vmatpush1.bf16.msra.mxu0 0
        %761 = vmatprep.subr.bf16.mxu0 0
        %762 = vmatpush1.bf16.msra.mxu0 0
        %763 = vmatprep.subr.bf16.mxu0 0
        %764 = vmatpush1.bf16.msra.mxu0 0
        %765 = vmatprep.subr.bf16.mxu0 0
        %766 = vmatpush1.bf16.msra.mxu0 0
        %767 = vmatprep.subr.bf16.mxu0 0
        %768 = vmatpush1.bf16.msra.mxu0 0
        %769 = vmatprep.subr.bf16.mxu0 0
        %770 = vmatpush1.bf16.msra.mxu0 0
        %771 = vmatprep.subr.bf16.mxu0 0
        %772 = vmatpush1.bf16.msra.mxu0 0
        %773 = vmatprep.subr.bf16.mxu0 0
        %774 = vmatpush1.bf16.msra.mxu0 0
        %775 = vmatprep.subr.bf16.mxu0 0
        %776 = vmatpush1.bf16.msra.mxu0 0
        %777 = vmatprep.subr.bf16.mxu0 0
        %778 = vmatpush1.bf16.msra.mxu0 0
        %779 = vmatprep.mubr.bf16.mxu0 0
        %780 = vmatmul.mubr.bf16.gmra.mrb[0].mxu0 %v724
        %v781 = vpop.f32.mrb[0].mxu0
        %v782 = vadd.f32 %v605, %v781
        %v783 = vpop.f32.mrb[0].mxu0
        %v784 = vpop.f32.mrb[0].mxu0
        %v785 = vadd.f32 %v610, %v784
        %v786 = vpop.f32.mrb[0].mxu0
        %787 = vmatprep.mubr.bf16.mxu0 0
        %788 = vmatmul.mubr.bf16.gmra.mrb[0].mxu0 %v727
        %v789 = vpop.f32.mrb[0].mxu0
        %v790 = vadd.f32 %v615, %v789
        %v791 = vpop.f32.mrb[0].mxu0
        %v792 = vpop.f32.mrb[0].mxu0
        %v793 = vadd.f32 %v620, %v792
        %v794 = vpop.f32.mrb[0].mxu0
        %795 = vmatprep.mubr.bf16.mxu0 0
        %796 = vmatmul.mubr.bf16.gmra.mrb[0].mxu0 %v730
        %v797 = vpop.f32.mrb[0].mxu0
        %v798 = vadd.f32 %v625, %v797
        %v799 = vpop.f32.mrb[0].mxu0
        %v800 = vpop.f32.mrb[0].mxu0
        %v801 = vadd.f32 %v630, %v800
        %v802 = vpop.f32.mrb[0].mxu0
        %803 = vmatprep.mubr.bf16.mxu0 0
        %804 = vmatmul.mubr.bf16.gmra.mrb[0].mxu0 %v733
        %v805 = vpop.f32.mrb[0].mxu0
        %v806 = vadd.f32 %v635, %v805
        %v807 = vpop.f32.mrb[0].mxu0
        %v808 = vpop.f32.mrb[0].mxu0
        %v809 = vadd.f32 %v640, %v808
        %v810 = vpop.f32.mrb[0].mxu0
        %811 = vmatprep.mubr.bf16.mxu0 0
        %812 = vmatmul.mubr.bf16.gmra.mrb[0].mxu0 %v736
        %v813 = vpop.f32.mrb[0].mxu0
        %v814 = vadd.f32 %v645, %v813
        %v815 = vpop.f32.mrb[0].mxu0
        %v816 = vpop.f32.mrb[0].mxu0
        %v817 = vadd.f32 %v650, %v816
        %v818 = vpop.f32.mrb[0].mxu0
        %819 = vmatprep.mubr.bf16.mxu0 0
        %820 = vmatmul.mubr.bf16.gmra.mrb[0].mxu0 %v739
        %v821 = vpop.f32.mrb[0].mxu0
        %v822 = vadd.f32 %v655, %v821
        %v823 = vpop.f32.mrb[0].mxu0
        %v824 = vpop.f32.mrb[0].mxu0
        %v825 = vadd.f32 %v660, %v824
        %v826 = vpop.f32.mrb[0].mxu0
        %827 = vmatprep.mubr.bf16.mxu0 0
        %828 = vmatmul.mubr.bf16.gmra.mrb[0].mxu0 %v742
        %v829 = vpop.f32.mrb[0].mxu0
        %v830 = vadd.f32 %v665, %v829
        %v831 = vpop.f32.mrb[0].mxu0
        %v832 = vpop.f32.mrb[0].mxu0
        %v833 = vadd.f32 %v670, %v832
        %v834 = vpop.f32.mrb[0].mxu0
        %835 = vmatprep.mubr.bf16.mxu0 0
        %836 = vmatmul.mubr.bf16.gmra.mrb[0].mxu0 %v745
        %v837 = vpop.f32.mrb[0].mxu0
        %v838 = vadd.f32 %v675, %v837
        %v839 = vpop.f32.mrb[0].mxu0
        %v840 = vpop.f32.mrb[0].mxu0
        %v841 = vadd.f32 %v680, %v840
        %v842 = vpop.f32.mrb[0].mxu0
        %843 = vdwg.mxu0
        %v844 = vmul.f32 %v782, 0.01
        %v845 = vmul.f32 %v785, 0.01
        %v846 = vmul.f32 %v790, 0.01
        %v847 = vmul.f32 %v793, 0.01
        %v848 = vmul.f32 %v798, 0.01
        %v849 = vmul.f32 %v801, 0.01
        %v850 = vmul.f32 %v806, 0.01
        %v851 = vmul.f32 %v809, 0.01
        %v852 = vmul.f32 %v814, 0.01
        %v853 = vmul.f32 %v817, 0.01
        %v854 = vmul.f32 %v822, 0.01
        %v855 = vmul.f32 %v825, 0.01
        %v856 = vmul.f32 %v830, 0.01
        %v857 = vmul.f32 %v833, 0.01
        %v858 = vmul.f32 %v838, 0.01
        %v859 = vmul.f32 %v841, 0.01
        %v860 = vmax.f32 %v782, %v844
        %v861 = vmax.f32 %v785, %v845
        %v862 = vmax.f32 %v790, %v846
        %v863 = vmax.f32 %v793, %v847
        %v864 = vmax.f32 %v798, %v848
        %v865 = vmax.f32 %v801, %v849
        %v866 = vmax.f32 %v806, %v850
        %v867 = vmax.f32 %v809, %v851
        %v868 = vmax.f32 %v814, %v852
        %v869 = vmax.f32 %v817, %v853
        %v870 = vmax.f32 %v822, %v854
        %v871 = vmax.f32 %v825, %v855
        %v872 = vmax.f32 %v830, %v856
        %v873 = vmax.f32 %v833, %v857
        %v874 = vmax.f32 %v838, %v858
        %v875 = vmax.f32 %v841, %v859
        %v876 = vld [vmem:[%s4] sm:$0xf]
        %v877 = vld [vmem:[%s4 + $0x4] sm:$0xf]
        %v878 = vld [vmem:[%s4 + $0x8] sm:$0xf]
        %v879 = vld [vmem:[%s4 + $0xc] sm:$0xf]
        %v880 = vld [vmem:[%s4 + $0x10] sm:$0xf]
        %v881 = vld [vmem:[%s4 + $0x14] sm:$0xf]
        %v882 = vld [vmem:[%s4 + $0x18] sm:$0xf]
        %v883 = vld [vmem:[%s4 + $0x1c] sm:$0xf]
        %v884 = vld [vmem:[%s4 + $0x20] sm:$0xf]
        %v885 = vld [vmem:[%s4 + $0x24] sm:$0xf]
        %v886 = vld [vmem:[%s4 + $0x28] sm:$0xf]
        %v887 = vld [vmem:[%s4 + $0x2c] sm:$0xf]
        %v888 = vld [vmem:[%s4 + $0x30] sm:$0xf]
        %v889 = vld [vmem:[%s4 + $0x34] sm:$0xf]
        %v890 = vld [vmem:[%s4 + $0x38] sm:$0xf]
        %v891 = vld [vmem:[%s4 + $0x3c] sm:$0xf]
        %v892 = vld [vmem:[%s4 + $0x40] sm:$0xf]
        %v893 = vld [vmem:[%s4 + $0x44] sm:$0xf]
        %v894 = vld [vmem:[%s4 + $0x48] sm:$0xf]
        %v895 = vld [vmem:[%s4 + $0x4c] sm:$0xf]
        %v896 = vld [vmem:[%s4 + $0x50] sm:$0xf]
        %v897 = vld [vmem:[%s4 + $0x54] sm:$0xf]
        %v898 = vld [vmem:[%s4 + $0x58] sm:$0xf]
        %v899 = vld [vmem:[%s4 + $0x5c] sm:$0xf]
        %v900 = vld [vmem:[%s4 + $0x60] sm:$0xf]
        %v901 = vld [vmem:[%s4 + $0x64] sm:$0xf]
        %v902 = vld [vmem:[%s4 + $0x68] sm:$0xf]
        %v903 = vld [vmem:[%s4 + $0x6c] sm:$0xf]
        %v904 = vld [vmem:[%s4 + $0x70] sm:$0xf]
        %v905 = vld [vmem:[%s4 + $0x74] sm:$0xf]
        %v906 = vld [vmem:[%s4 + $0x78] sm:$0xf]
        %v907 = vld [vmem:[%s4 + $0x7c] sm:$0xf]
        %v908 = vpack.c.bf16 %v861, %v860
        %v909 = vpack.c.bf16 %v863, %v862
        %v910 = vpack.c.bf16 %v865, %v864
        %v911 = vpack.c.bf16 %v867, %v866
        %v912 = vpack.c.bf16 %v869, %v868
        %v913 = vpack.c.bf16 %v871, %v870
        %v914 = vpack.c.bf16 %v873, %v872
        %v915 = vpack.c.bf16 %v875, %v874
        %v916 = vld [vmem:[%s5] sm:$0xff]
        %v917 = vld [vmem:[%s5 + $0x8] sm:$0xff]
        %v918 = vld [vmem:[%s5 + $0x10] sm:$0xff]
        %v919 = vld [vmem:[%s5 + $0x18] sm:$0xff]
        %v920 = vld [vmem:[%s5 + $0x20] sm:$0xff]
        %v921 = vld [vmem:[%s5 + $0x28] sm:$0xff]
        %v922 = vld [vmem:[%s5 + $0x30] sm:$0xff]
        %v923 = vld [vmem:[%s5 + $0x38] sm:$0xff]
        %v924 = vld [vmem:[%s5 + $0x40] sm:$0xff]
        %v925 = vld [vmem:[%s5 + $0x48] sm:$0xff]
        %v926 = vld [vmem:[%s5 + $0x50] sm:$0xff]
        %v927 = vld [vmem:[%s5 + $0x58] sm:$0xff]
        %v928 = vld [vmem:[%s5 + $0x60] sm:$0xff]
        %v929 = vld [vmem:[%s5 + $0x68] sm:$0xff]
        %v930 = vld [vmem:[%s5 + $0x70] sm:$0xff]
        %v931 = vld [vmem:[%s5 + $0x78] sm:$0xff]
        %v932 = vld [vmem:[%s5 + $0x80] sm:$0xff]
        %v933 = vld [vmem:[%s5 + $0x88] sm:$0xff]
        %v934 = vld [vmem:[%s5 + $0x90] sm:$0xff]
        %v935 = vld [vmem:[%s5 + $0x98] sm:$0xff]
        %v936 = vld [vmem:[%s5 + $0xa0] sm:$0xff]
        %v937 = vld [vmem:[%s5 + $0xa8] sm:$0xff]
        %v938 = vld [vmem:[%s5 + $0xb0] sm:$0xff]
        %v939 = vld [vmem:[%s5 + $0xb8] sm:$0xff]
        %v940 = vld [vmem:[%s5 + $0xc0] sm:$0xff]
        %v941 = vld [vmem:[%s5 + $0xc8] sm:$0xff]
        %v942 = vld [vmem:[%s5 + $0xd0] sm:$0xff]
        %v943 = vld [vmem:[%s5 + $0xd8] sm:$0xff]
        %v944 = vld [vmem:[%s5 + $0xe0] sm:$0xff]
        %v945 = vld [vmem:[%s5 + $0xe8] sm:$0xff]
        %v946 = vld [vmem:[%s5 + $0xf0] sm:$0xff]
        %v947 = vld [vmem:[%s5 + $0xf8] sm:$0xff]
        %949 = vset.pattern.permute.xlu0 0
        %950 = vperm.xlu0 %949, %v916
        %v951 = vpop.permute.xlu0 %950
        %954 = vset.pattern.permute.xlu0 0
        %955 = vperm.xlu0 %954, %v917
        %v956 = vpop.permute.xlu0 %955
        %959 = vset.pattern.permute.xlu0 0
        %960 = vperm.xlu0 %959, %v918
        %v961 = vpop.permute.xlu0 %960
        %964 = vset.pattern.permute.xlu0 0
        %965 = vperm.xlu0 %964, %v919
        %v966 = vpop.permute.xlu0 %965
        %969 = vset.pattern.permute.xlu0 0
        %970 = vperm.xlu0 %969, %v920
        %v971 = vpop.permute.xlu0 %970
        %974 = vset.pattern.permute.xlu0 0
        %975 = vperm.xlu0 %974, %v921
        %v976 = vpop.permute.xlu0 %975
        %979 = vset.pattern.permute.xlu0 0
        %980 = vperm.xlu0 %979, %v922
        %v981 = vpop.permute.xlu0 %980
        %984 = vset.pattern.permute.xlu0 0
        %985 = vperm.xlu0 %984, %v923
        %v986 = vpop.permute.xlu0 %985
        %989 = vset.pattern.permute.xlu0 0
        %990 = vperm.xlu0 %989, %v924
        %v991 = vpop.permute.xlu0 %990
        %994 = vset.pattern.permute.xlu0 0
        %995 = vperm.xlu0 %994, %v925
        %v996 = vpop.permute.xlu0 %995
        %999 = vset.pattern.permute.xlu0 0
        %1000 = vperm.xlu0 %999, %v926
        %v1001 = vpop.permute.xlu0 %1000
        %1004 = vset.pattern.permute.xlu0 0
        %1005 = vperm.xlu0 %1004, %v927
        %v1006 = vpop.permute.xlu0 %1005
        %1009 = vset.pattern.permute.xlu0 0
        %1010 = vperm.xlu0 %1009, %v928
        %v1011 = vpop.permute.xlu0 %1010
        %1014 = vset.pattern.permute.xlu0 0
        %1015 = vperm.xlu0 %1014, %v929
        %v1016 = vpop.permute.xlu0 %1015
        %1019 = vset.pattern.permute.xlu0 0
        %1020 = vperm.xlu0 %1019, %v930
        %v1021 = vpop.permute.xlu0 %1020
        %1024 = vset.pattern.permute.xlu0 0
        %1025 = vperm.xlu0 %1024, %v931
        %v1026 = vpop.permute.xlu0 %1025
        %1029 = vset.pattern.permute.xlu0 0
        %1030 = vperm.xlu0 %1029, %v932
        %v1031 = vpop.permute.xlu0 %1030
        %1034 = vset.pattern.permute.xlu0 0
        %1035 = vperm.xlu0 %1034, %v933
        %v1036 = vpop.permute.xlu0 %1035
        %1039 = vset.pattern.permute.xlu0 0
        %1040 = vperm.xlu0 %1039, %v934
        %v1041 = vpop.permute.xlu0 %1040
        %1044 = vset.pattern.permute.xlu0 0
        %1045 = vperm.xlu0 %1044, %v935
        %v1046 = vpop.permute.xlu0 %1045
        %1049 = vset.pattern.permute.xlu0 0
        %1050 = vperm.xlu0 %1049, %v936
        %v1051 = vpop.permute.xlu0 %1050
        %1054 = vset.pattern.permute.xlu0 0
        %1055 = vperm.xlu0 %1054, %v937
        %v1056 = vpop.permute.xlu0 %1055
        %1059 = vset.pattern.permute.xlu0 0
        %1060 = vperm.xlu0 %1059, %v938
        %v1061 = vpop.permute.xlu0 %1060
        %1064 = vset.pattern.permute.xlu0 0
        %1065 = vperm.xlu0 %1064, %v939
        %v1066 = vpop.permute.xlu0 %1065
        %1069 = vset.pattern.permute.xlu0 0
        %1070 = vperm.xlu0 %1069, %v940
        %v1071 = vpop.permute.xlu0 %1070
        %1074 = vset.pattern.permute.xlu0 0
        %1075 = vperm.xlu0 %1074, %v941
        %v1076 = vpop.permute.xlu0 %1075
        %1079 = vset.pattern.permute.xlu0 0
        %1080 = vperm.xlu0 %1079, %v942
        %v1081 = vpop.permute.xlu0 %1080
        %1084 = vset.pattern.permute.xlu0 0
        %1085 = vperm.xlu0 %1084, %v943
        %v1086 = vpop.permute.xlu0 %1085
        %1089 = vset.pattern.permute.xlu0 0
        %1090 = vperm.xlu0 %1089, %v944
        %v1091 = vpop.permute.xlu0 %1090
        %1094 = vset.pattern.permute.xlu0 0
        %1095 = vperm.xlu0 %1094, %v945
        %v1096 = vpop.permute.xlu0 %1095
        %1099 = vset.pattern.permute.xlu0 0
        %1100 = vperm.xlu0 %1099, %v946
        %v1101 = vpop.permute.xlu0 %1100
        %1104 = vset.pattern.permute.xlu0 0
        %1105 = vperm.xlu0 %1104, %v947
        %v1106 = vpop.permute.xlu0 %1105
        %v1140 = vunpack.c.l.b16 %v876
        %v1141 = vunpack.c.l.b16 %v877
        %v1142 = vunpack.c.l.b16 %v878
        %v1143 = vunpack.c.l.b16 %v879
        %v1144 = vunpack.c.l.b16 %v880
        %v1145 = vunpack.c.l.b16 %v881
        %v1146 = vunpack.c.l.b16 %v882
        %v1147 = vunpack.c.l.b16 %v883
        %v1148 = vunpack.c.l.b16 %v884
        %v1149 = vunpack.c.l.b16 %v885
        %v1150 = vunpack.c.l.b16 %v886
        %v1151 = vunpack.c.l.b16 %v887
        %v1152 = vunpack.c.l.b16 %v888
        %v1153 = vunpack.c.l.b16 %v889
        %v1154 = vunpack.c.l.b16 %v890
        %v1155 = vunpack.c.l.b16 %v891
        %v1156 = vunpack.c.l.b16 %v892
        %v1157 = vunpack.c.l.b16 %v893
        %v1158 = vunpack.c.l.b16 %v894
        %v1159 = vunpack.c.l.b16 %v895
        %v1160 = vunpack.c.l.b16 %v896
        %v1161 = vunpack.c.l.b16 %v897
        %v1162 = vunpack.c.l.b16 %v898
        %v1163 = vunpack.c.l.b16 %v899
        %v1164 = vunpack.c.l.b16 %v900
        %v1165 = vunpack.c.l.b16 %v901
        %v1166 = vunpack.c.l.b16 %v902
        %v1167 = vunpack.c.l.b16 %v903
        %v1168 = vunpack.c.l.b16 %v904
        %v1169 = vunpack.c.l.b16 %v905
        %v1170 = vunpack.c.l.b16 %v906
        %v1171 = vunpack.c.l.b16 %v907
        %v1172 = vpack.c.b16 %v1141, %v1140
        %v1173 = vpack.c.b16 %v1143, %v1142
        %v1174 = vpack.c.b16 %v1145, %v1144
        %v1175 = vpack.c.b16 %v1147, %v1146
        %v1176 = vpack.c.b16 %v1149, %v1148
        %v1177 = vpack.c.b16 %v1151, %v1150
        %v1178 = vpack.c.b16 %v1153, %v1152
        %v1179 = vpack.c.b16 %v1155, %v1154
        %v1180 = vpack.c.b16 %v1157, %v1156
        %v1181 = vpack.c.b16 %v1159, %v1158
        %v1182 = vpack.c.b16 %v1161, %v1160
        %v1183 = vpack.c.b16 %v1163, %v1162
        %v1184 = vpack.c.b16 %v1165, %v1164
        %v1185 = vpack.c.b16 %v1167, %v1166
        %v1186 = vpack.c.b16 %v1169, %v1168
        %v1187 = vpack.c.b16 %v1171, %v1170
        %1204 = vmatprep.subr.bf16.mxu0 0
        %1205 = vmatpush1.bf16.msra.mxu0 %v908
        %1206 = vmatprep.subr.bf16.mxu0 0
        %1207 = vmatpush1.bf16.msra.mxu0 %v909
        %1208 = vmatprep.subr.bf16.mxu0 0
        %1209 = vmatpush1.bf16.msra.mxu0 %v910
        %1210 = vmatprep.subr.bf16.mxu0 0
        %1211 = vmatpush1.bf16.msra.mxu0 %v911
        %1212 = vmatprep.subr.bf16.mxu0 0
        %1213 = vmatpush1.bf16.msra.mxu0 %v912
        %1214 = vmatprep.subr.bf16.mxu0 0
        %1215 = vmatpush1.bf16.msra.mxu0 %v913
        %1216 = vmatprep.subr.bf16.mxu0 0
        %1217 = vmatpush1.bf16.msra.mxu0 %v914
        %1218 = vmatprep.subr.bf16.mxu0 0
        %1219 = vmatpush1.bf16.msra.mxu0 %v915
        %1220 = vmatprep.subr.bf16.mxu0 0
        %1221 = vmatpush1.bf16.msra.mxu0 0
        %1222 = vmatprep.subr.bf16.mxu0 0
        %1223 = vmatpush1.bf16.msra.mxu0 0
        %1224 = vmatprep.subr.bf16.mxu0 0
        %1225 = vmatpush1.bf16.msra.mxu0 0
        %1226 = vmatprep.subr.bf16.mxu0 0
        %1227 = vmatpush1.bf16.msra.mxu0 0
        %1228 = vmatprep.subr.bf16.mxu0 0
        %1229 = vmatpush1.bf16.msra.mxu0 0
        %1230 = vmatprep.subr.bf16.mxu0 0
        %1231 = vmatpush1.bf16.msra.mxu0 0
        %1232 = vmatprep.subr.bf16.mxu0 0
        %1233 = vmatpush1.bf16.msra.mxu0 0
        %1234 = vmatprep.subr.bf16.mxu0 0
        %1235 = vmatpush1.bf16.msra.mxu0 0
        %1236 = vmatprep.mubr.bf16.mxu0 0
        %1237 = vmatmul.mubr.bf16.gmra.mrb[0].mxu0 %v1172
        %v1238 = vpop.f32.mrb[0].mxu0
        %v1239 = vadd.f32 %v951, %v1238
        %v1240 = vpop.f32.mrb[0].mxu0
        %v1241 = vpop.f32.mrb[0].mxu0
        %v1242 = vadd.f32 %v956, %v1241
        %v1243 = vpop.f32.mrb[0].mxu0
        %1244 = vmatprep.mubr.bf16.mxu0 0
        %1245 = vmatmul.mubr.bf16.gmra.mrb[0].mxu0 %v1173
        %v1246 = vpop.f32.mrb[0].mxu0
        %v1247 = vadd.f32 %v961, %v1246
        %v1248 = vpop.f32.mrb[0].mxu0
        %v1249 = vpop.f32.mrb[0].mxu0
        %v1250 = vadd.f32 %v966, %v1249
        %v1251 = vpop.f32.mrb[0].mxu0
        %1252 = vmatprep.mubr.bf16.mxu0 0
        %1253 = vmatmul.mubr.bf16.gmra.mrb[0].mxu0 %v1174
        %v1254 = vpop.f32.mrb[0].mxu0
        %v1255 = vadd.f32 %v971, %v1254
        %v1256 = vpop.f32.mrb[0].mxu0
        %v1257 = vpop.f32.mrb[0].mxu0
        %v1258 = vadd.f32 %v976, %v1257
        %v1259 = vpop.f32.mrb[0].mxu0
        %1260 = vmatprep.mubr.bf16.mxu0 0
        %1261 = vmatmul.mubr.bf16.gmra.mrb[0].mxu0 %v1175
        %v1262 = vpop.f32.mrb[0].mxu0
        %v1263 = vadd.f32 %v981, %v1262
        %v1264 = vpop.f32.mrb[0].mxu0
        %v1265 = vpop.f32.mrb[0].mxu0
        %v1266 = vadd.f32 %v986, %v1265
        %v1267 = vpop.f32.mrb[0].mxu0
        %1268 = vmatprep.mubr.bf16.mxu0 0
        %1269 = vmatmul.mubr.bf16.gmra.mrb[0].mxu0 %v1176
        %v1270 = vpop.f32.mrb[0].mxu0
        %v1271 = vadd.f32 %v991, %v1270
        %v1272 = vpop.f32.mrb[0].mxu0
        %v1273 = vpop.f32.mrb[0].mxu0
        %v1274 = vadd.f32 %v996, %v1273
        %v1275 = vpop.f32.mrb[0].mxu0
        %1276 = vmatprep.mubr.bf16.mxu0 0
        %1277 = vmatmul.mubr.bf16.gmra.mrb[0].mxu0 %v1177
        %v1278 = vpop.f32.mrb[0].mxu0
        %v1279 = vadd.f32 %v1001, %v1278
        %v1280 = vpop.f32.mrb[0].mxu0
        %v1281 = vpop.f32.mrb[0].mxu0
        %v1282 = vadd.f32 %v1006, %v1281
        %v1283 = vpop.f32.mrb[0].mxu0
        %1284 = vmatprep.mubr.bf16.mxu0 0
        %1285 = vmatmul.mubr.bf16.gmra.mrb[0].mxu0 %v1178
        %v1286 = vpop.f32.mrb[0].mxu0
        %v1287 = vadd.f32 %v1011, %v1286
        %v1288 = vpop.f32.mrb[0].mxu0
        %v1289 = vpop.f32.mrb[0].mxu0
        %v1290 = vadd.f32 %v1016, %v1289
        %v1291 = vpop.f32.mrb[0].mxu0
        %1292 = vmatprep.mubr.bf16.mxu0 0
        %1293 = vmatmul.mubr.bf16.gmra.mrb[0].mxu0 %v1179
        %v1294 = vpop.f32.mrb[0].mxu0
        %v1295 = vadd.f32 %v1021, %v1294
        %v1296 = vpop.f32.mrb[0].mxu0
        %v1297 = vpop.f32.mrb[0].mxu0
        %v1298 = vadd.f32 %v1026, %v1297
        %v1299 = vpop.f32.mrb[0].mxu0
        %1300 = vmatprep.mubr.bf16.mxu0 0
        %1301 = vmatmul.mubr.bf16.gmra.mrb[0].mxu0 %v1180
        %v1302 = vpop.f32.mrb[0].mxu0
        %v1303 = vadd.f32 %v1031, %v1302
        %v1304 = vpop.f32.mrb[0].mxu0
        %v1305 = vpop.f32.mrb[0].mxu0
        %v1306 = vadd.f32 %v1036, %v1305
        %v1307 = vpop.f32.mrb[0].mxu0
        %1308 = vmatprep.mubr.bf16.mxu0 0
        %1309 = vmatmul.mubr.bf16.gmra.mrb[0].mxu0 %v1181
        %v1310 = vpop.f32.mrb[0].mxu0
        %v1311 = vadd.f32 %v1041, %v1310
        %v1312 = vpop.f32.mrb[0].mxu0
        %v1313 = vpop.f32.mrb[0].mxu0
        %v1314 = vadd.f32 %v1046, %v1313
        %v1315 = vpop.f32.mrb[0].mxu0
        %1316 = vmatprep.mubr.bf16.mxu0 0
        %1317 = vmatmul.mubr.bf16.gmra.mrb[0].mxu0 %v1182
        %v1318 = vpop.f32.mrb[0].mxu0
        %v1319 = vadd.f32 %v1051, %v1318
        %v1320 = vpop.f32.mrb[0].mxu0
        %v1321 = vpop.f32.mrb[0].mxu0
        %v1322 = vadd.f32 %v1056, %v1321
        %v1323 = vpop.f32.mrb[0].mxu0
        %1324 = vmatprep.mubr.bf16.mxu0 0
        %1325 = vmatmul.mubr.bf16.gmra.mrb[0].mxu0 %v1183
        %v1326 = vpop.f32.mrb[0].mxu0
        %v1327 = vadd.f32 %v1061, %v1326
        %v1328 = vpop.f32.mrb[0].mxu0
        %v1329 = vpop.f32.mrb[0].mxu0
        %v1330 = vadd.f32 %v1066, %v1329
        %v1331 = vpop.f32.mrb[0].mxu0
        %1332 = vmatprep.mubr.bf16.mxu0 0
        %1333 = vmatmul.mubr.bf16.gmra.mrb[0].mxu0 %v1184
        %v1334 = vpop.f32.mrb[0].mxu0
        %v1335 = vadd.f32 %v1071, %v1334
        %v1336 = vpop.f32.mrb[0].mxu0
        %v1337 = vpop.f32.mrb[0].mxu0
        %v1338 = vadd.f32 %v1076, %v1337
        %v1339 = vpop.f32.mrb[0].mxu0
        %1340 = vmatprep.mubr.bf16.mxu0 0
        %1341 = vmatmul.mubr.bf16.gmra.mrb[0].mxu0 %v1185
        %v1342 = vpop.f32.mrb[0].mxu0
        %v1343 = vadd.f32 %v1081, %v1342
        %v1344 = vpop.f32.mrb[0].mxu0
        %v1345 = vpop.f32.mrb[0].mxu0
        %v1346 = vadd.f32 %v1086, %v1345
        %v1347 = vpop.f32.mrb[0].mxu0
        %1348 = vmatprep.mubr.bf16.mxu0 0
        %1349 = vmatmul.mubr.bf16.gmra.mrb[0].mxu0 %v1186
        %v1350 = vpop.f32.mrb[0].mxu0
        %v1351 = vadd.f32 %v1091, %v1350
        %v1352 = vpop.f32.mrb[0].mxu0
        %v1353 = vpop.f32.mrb[0].mxu0
        %v1354 = vadd.f32 %v1096, %v1353
        %v1355 = vpop.f32.mrb[0].mxu0
        %1356 = vmatprep.mubr.bf16.mxu0 0
        %1357 = vmatmul.mubr.bf16.gmra.mrb[0].mxu0 %v1187
        %v1358 = vpop.f32.mrb[0].mxu0
        %v1359 = vadd.f32 %v1101, %v1358
        %v1360 = vpop.f32.mrb[0].mxu0
        %v1361 = vpop.f32.mrb[0].mxu0
        %v1362 = vadd.f32 %v1106, %v1361
        %v1363 = vpop.f32.mrb[0].mxu0
        %1364 = vdwg.mxu0
        %v1365 = vmul.f32 %v1239, 0.01
        %v1366 = vmul.f32 %v1242, 0.01
        %v1367 = vmul.f32 %v1247, 0.01
        %v1368 = vmul.f32 %v1250, 0.01
        %v1369 = vmul.f32 %v1255, 0.01
        %v1370 = vmul.f32 %v1258, 0.01
        %v1371 = vmul.f32 %v1263, 0.01
        %v1372 = vmul.f32 %v1266, 0.01
        %v1373 = vmul.f32 %v1271, 0.01
        %v1374 = vmul.f32 %v1274, 0.01
        %v1375 = vmul.f32 %v1279, 0.01
        %v1376 = vmul.f32 %v1282, 0.01
        %v1377 = vmul.f32 %v1287, 0.01
        %v1378 = vmul.f32 %v1290, 0.01
        %v1379 = vmul.f32 %v1295, 0.01
        %v1380 = vmul.f32 %v1298, 0.01
        %v1381 = vmul.f32 %v1303, 0.01
        %v1382 = vmul.f32 %v1306, 0.01
        %v1383 = vmul.f32 %v1311, 0.01
        %v1384 = vmul.f32 %v1314, 0.01
        %v1385 = vmul.f32 %v1319, 0.01
        %v1386 = vmul.f32 %v1322, 0.01
        %v1387 = vmul.f32 %v1327, 0.01
        %v1388 = vmul.f32 %v1330, 0.01
        %v1389 = vmul.f32 %v1335, 0.01
        %v1390 = vmul.f32 %v1338, 0.01
        %v1391 = vmul.f32 %v1343, 0.01
        %v1392 = vmul.f32 %v1346, 0.01
        %v1393 = vmul.f32 %v1351, 0.01
        %v1394 = vmul.f32 %v1354, 0.01
        %v1395 = vmul.f32 %v1359, 0.01
        %v1396 = vmul.f32 %v1362, 0.01
        %v1397 = vmax.f32 %v1239, %v1365
        %v1398 = vmax.f32 %v1242, %v1366
        %v1399 = vmax.f32 %v1247, %v1367
        %v1400 = vmax.f32 %v1250, %v1368
        %v1401 = vmax.f32 %v1255, %v1369
        %v1402 = vmax.f32 %v1258, %v1370
        %v1403 = vmax.f32 %v1263, %v1371
        %v1404 = vmax.f32 %v1266, %v1372
        %v1405 = vmax.f32 %v1271, %v1373
        %v1406 = vmax.f32 %v1274, %v1374
        %v1407 = vmax.f32 %v1279, %v1375
        %v1408 = vmax.f32 %v1282, %v1376
        %v1409 = vmax.f32 %v1287, %v1377
        %v1410 = vmax.f32 %v1290, %v1378
        %v1411 = vmax.f32 %v1295, %v1379
        %v1412 = vmax.f32 %v1298, %v1380
        %v1413 = vmax.f32 %v1303, %v1381
        %v1414 = vmax.f32 %v1306, %v1382
        %v1415 = vmax.f32 %v1311, %v1383
        %v1416 = vmax.f32 %v1314, %v1384
        %v1417 = vmax.f32 %v1319, %v1385
        %v1418 = vmax.f32 %v1322, %v1386
        %v1419 = vmax.f32 %v1327, %v1387
        %v1420 = vmax.f32 %v1330, %v1388
        %v1421 = vmax.f32 %v1335, %v1389
        %v1422 = vmax.f32 %v1338, %v1390
        %v1423 = vmax.f32 %v1343, %v1391
        %v1424 = vmax.f32 %v1346, %v1392
        %v1425 = vmax.f32 %v1351, %v1393
        %v1426 = vmax.f32 %v1354, %v1394
        %v1427 = vmax.f32 %v1359, %v1395
        %v1428 = vmax.f32 %v1362, %v1396
        %1429 = vst [vmem:[%s307] sm:$0xff] %v1397
        %1430 = vst [vmem:[%s307 + $0x8] sm:$0xff] %v1398
        %1431 = vst [vmem:[%s307 + $0x10] sm:$0xff] %v1399
        %1432 = vst [vmem:[%s307 + $0x18] sm:$0xff] %v1400
        %1433 = vst [vmem:[%s307 + $0x20] sm:$0xff] %v1401
        %1434 = vst [vmem:[%s307 + $0x28] sm:$0xff] %v1402
        %1435 = vst [vmem:[%s307 + $0x30] sm:$0xff] %v1403
        %1436 = vst [vmem:[%s307 + $0x38] sm:$0xff] %v1404
        %1437 = vst [vmem:[%s307 + $0x40] sm:$0xff] %v1405
        %1438 = vst [vmem:[%s307 + $0x48] sm:$0xff] %v1406
        %1439 = vst [vmem:[%s307 + $0x50] sm:$0xff] %v1407
        %1440 = vst [vmem:[%s307 + $0x58] sm:$0xff] %v1408
        %1441 = vst [vmem:[%s307 + $0x60] sm:$0xff] %v1409
        %1442 = vst [vmem:[%s307 + $0x68] sm:$0xff] %v1410
        %1443 = vst [vmem:[%s307 + $0x70] sm:$0xff] %v1411
        %1444 = vst [vmem:[%s307 + $0x78] sm:$0xff] %v1412
        %1445 = vst [vmem:[%s307 + $0x80] sm:$0xff] %v1413
        %1446 = vst [vmem:[%s307 + $0x88] sm:$0xff] %v1414
        %1447 = vst [vmem:[%s307 + $0x90] sm:$0xff] %v1415
        %1448 = vst [vmem:[%s307 + $0x98] sm:$0xff] %v1416
        %1449 = vst [vmem:[%s307 + $0xa0] sm:$0xff] %v1417
        %1450 = vst [vmem:[%s307 + $0xa8] sm:$0xff] %v1418
        %1451 = vst [vmem:[%s307 + $0xb0] sm:$0xff] %v1419
        %1452 = vst [vmem:[%s307 + $0xb8] sm:$0xff] %v1420
        %1453 = vst [vmem:[%s307 + $0xc0] sm:$0xff] %v1421
        %1454 = vst [vmem:[%s307 + $0xc8] sm:$0xff] %v1422
        %1455 = vst [vmem:[%s307 + $0xd0] sm:$0xff] %v1423
        %1456 = vst [vmem:[%s307 + $0xd8] sm:$0xff] %v1424
        %1457 = vst [vmem:[%s307 + $0xe0] sm:$0xff] %v1425
        %1458 = vst [vmem:[%s307 + $0xe8] sm:$0xff] %v1426
        %1459 = vst [vmem:[%s307 + $0xf0] sm:$0xff] %v1427
        %1460 = vst [vmem:[%s307 + $0xf8] sm:$0xff] %v1428
        %1461 = vmax.xlane.f32.xlu0 %v1397
        %v1462 = vpop.xlane.xlu0 %1461
        %1463 = vmax.xlane.f32.xlu0 %v1398
        %v1464 = vpop.xlane.xlu0 %1463
        %1465 = vmax.xlane.f32.xlu0 %v1399
        %v1466 = vpop.xlane.xlu0 %1465
        %1467 = vmax.xlane.f32.xlu0 %v1400
        %v1468 = vpop.xlane.xlu0 %1467
        %1469 = vmax.xlane.f32.xlu0 %v1401
        %v1470 = vpop.xlane.xlu0 %1469
        %1471 = vmax.xlane.f32.xlu0 %v1402
        %v1472 = vpop.xlane.xlu0 %1471
        %1473 = vmax.xlane.f32.xlu0 %v1403
        %v1474 = vpop.xlane.xlu0 %1473
        %1475 = vmax.xlane.f32.xlu0 %v1404
        %v1476 = vpop.xlane.xlu0 %1475
        %1477 = vmax.xlane.f32.xlu0 %v1405
        %v1478 = vpop.xlane.xlu0 %1477
        %1479 = vmax.xlane.f32.xlu0 %v1406
        %v1480 = vpop.xlane.xlu0 %1479
        %1481 = vmax.xlane.f32.xlu0 %v1407
        %v1482 = vpop.xlane.xlu0 %1481
        %1483 = vmax.xlane.f32.xlu0 %v1408
        %v1484 = vpop.xlane.xlu0 %1483
        %1485 = vmax.xlane.f32.xlu0 %v1409
        %v1486 = vpop.xlane.xlu0 %1485
        %1487 = vmax.xlane.f32.xlu0 %v1410
        %v1488 = vpop.xlane.xlu0 %1487
        %1489 = vmax.xlane.f32.xlu0 %v1411
        %v1490 = vpop.xlane.xlu0 %1489
        %1491 = vmax.xlane.f32.xlu0 %v1412
        %v1492 = vpop.xlane.xlu0 %1491
        %1493 = vmax.xlane.f32.xlu0 %v1413
        %v1494 = vpop.xlane.xlu0 %1493
        %1495 = vmax.xlane.f32.xlu0 %v1414
        %v1496 = vpop.xlane.xlu0 %1495
        %1497 = vmax.xlane.f32.xlu0 %v1415
        %v1498 = vpop.xlane.xlu0 %1497
        %1499 = vmax.xlane.f32.xlu0 %v1416
        %v1500 = vpop.xlane.xlu0 %1499
        %1501 = vmax.xlane.f32.xlu0 %v1417
        %v1502 = vpop.xlane.xlu0 %1501
        %1503 = vmax.xlane.f32.xlu0 %v1418
        %v1504 = vpop.xlane.xlu0 %1503
        %1505 = vmax.xlane.f32.xlu0 %v1419
        %v1506 = vpop.xlane.xlu0 %1505
        %1507 = vmax.xlane.f32.xlu0 %v1420
        %v1508 = vpop.xlane.xlu0 %1507
        %1509 = vmax.xlane.f32.xlu0 %v1421
        %v1510 = vpop.xlane.xlu0 %1509
        %1511 = vmax.xlane.f32.xlu0 %v1422
        %v1512 = vpop.xlane.xlu0 %1511
        %1513 = vmax.xlane.f32.xlu0 %v1423
        %v1514 = vpop.xlane.xlu0 %1513
        %1515 = vmax.xlane.f32.xlu0 %v1424
        %v1516 = vpop.xlane.xlu0 %1515
        %1517 = vmax.xlane.f32.xlu0 %v1425
        %v1518 = vpop.xlane.xlu0 %1517
        %1519 = vmax.xlane.f32.xlu0 %v1426
        %v1520 = vpop.xlane.xlu0 %1519
        %1521 = vmax.xlane.f32.xlu0 %v1427
        %v1522 = vpop.xlane.xlu0 %1521
        %1523 = vmax.xlane.f32.xlu0 %v1428
        %v1524 = vpop.xlane.xlu0 %1523
        %vm1525 = vcmask 7168
        %1526 = vst.msk [vmem:[%s331] sm:$0xff] %vm1525, %v1462
        %1527 = vst.msk [vmem:[%s331 + $0x8] sm:$0xff] %vm1525, %v1464
        %1528 = vst.msk [vmem:[%s331 + $0x10] sm:$0xff] %vm1525, %v1466
        %1529 = vst.msk [vmem:[%s331 + $0x18] sm:$0xff] %vm1525, %v1468
        %1530 = vst.msk [vmem:[%s331 + $0x20] sm:$0xff] %vm1525, %v1470
        %1531 = vst.msk [vmem:[%s331 + $0x28] sm:$0xff] %vm1525, %v1472
        %1532 = vst.msk [vmem:[%s331 + $0x30] sm:$0xff] %vm1525, %v1474
        %1533 = vst.msk [vmem:[%s331 + $0x38] sm:$0xff] %vm1525, %v1476
        %1534 = vst.msk [vmem:[%s331 + $0x40] sm:$0xff] %vm1525, %v1478
        %1535 = vst.msk [vmem:[%s331 + $0x48] sm:$0xff] %vm1525, %v1480
        %1536 = vst.msk [vmem:[%s331 + $0x50] sm:$0xff] %vm1525, %v1482
        %1537 = vst.msk [vmem:[%s331 + $0x58] sm:$0xff] %vm1525, %v1484
        %1538 = vst.msk [vmem:[%s331 + $0x60] sm:$0xff] %vm1525, %v1486
        %1539 = vst.msk [vmem:[%s331 + $0x68] sm:$0xff] %vm1525, %v1488
        %1540 = vst.msk [vmem:[%s331 + $0x70] sm:$0xff] %vm1525, %v1490
        %1541 = vst.msk [vmem:[%s331 + $0x78] sm:$0xff] %vm1525, %v1492
        %1542 = vst.msk [vmem:[%s331 + $0x80] sm:$0xff] %vm1525, %v1494
        %1543 = vst.msk [vmem:[%s331 + $0x88] sm:$0xff] %vm1525, %v1496
        %1544 = vst.msk [vmem:[%s331 + $0x90] sm:$0xff] %vm1525, %v1498
        %1545 = vst.msk [vmem:[%s331 + $0x98] sm:$0xff] %vm1525, %v1500
        %1546 = vst.msk [vmem:[%s331 + $0xa0] sm:$0xff] %vm1525, %v1502
        %1547 = vst.msk [vmem:[%s331 + $0xa8] sm:$0xff] %vm1525, %v1504
        %1548 = vst.msk [vmem:[%s331 + $0xb0] sm:$0xff] %vm1525, %v1506
        %1549 = vst.msk [vmem:[%s331 + $0xb8] sm:$0xff] %vm1525, %v1508
        %1550 = vst.msk [vmem:[%s331 + $0xc0] sm:$0xff] %vm1525, %v1510
        %1551 = vst.msk [vmem:[%s331 + $0xc8] sm:$0xff] %vm1525, %v1512
        %1552 = vst.msk [vmem:[%s331 + $0xd0] sm:$0xff] %vm1525, %v1514
        %1553 = vst.msk [vmem:[%s331 + $0xd8] sm:$0xff] %vm1525, %v1516
        %1554 = vst.msk [vmem:[%s331 + $0xe0] sm:$0xff] %vm1525, %v1518
        %1555 = vst.msk [vmem:[%s331 + $0xe8] sm:$0xff] %vm1525, %v1520
        %1556 = vst.msk [vmem:[%s331 + $0xf0] sm:$0xff] %vm1525, %v1522
        %1557 = vst.msk [vmem:[%s331 + $0xf8] sm:$0xff] %vm1525, %v1524
        %s1558 = sand.u32 %s182, 1
        %s1559 = scalar_lea.sflag [#allocation4], %s1558
        %s1560 = sand.u32 %s182, 1
        %s1561 = smul.addr %s1560, 256
        %s1562 = scalar_lea.vmem [#allocation3], %s1561
        %p1563 = scmp.lt.s32.totalorder %s26, 1
        %s1564 = scalar_select %p1563, %s26, 1
        %s1565 = smul.addr %s1564, 32
        %s1566 = smul.addr %s1565, 8
        %s1567 = scalar_lea.vmem %s7, %s1566
        // Predicated region
        $region45: #{tpu_custom_call.1} parent=43 // pred_check
          %p1568 = pneg %p192
        $region46: #{tpu_custom_call.1} parent=43 // pred_check_branch
          %1570 = sbr.rel (%p1568) target = $region48
        $region47: #{tpu_custom_call.1} parent=43 // pred_region
          %s1572 = ssub.s32 4096, 4096
          %1573 = vsyncadd %s1559, %s1572
          %s1574 = smul.addr %s26, 32
          %s1575 = sadd.s32 %s27, %s1574
          %s1576 = smul.addr %s1575, 128
          %s1577 = scalar_lea.hbm %s6, %s1576
          %s1578 = sshll.u32 %s1562, 4
          %s1579 = int_to_ptr.vmem [resolvable:$true] %s1578
          %1584 = dma.vmem_to_hbm [thread:$0]  %s1579, 4096, %s1577, %s1559, 128, 128, 8
        $region48: #{tpu_custom_call.1} parent=43 // pred_fallthru
          _
        // Predicated region
        $region49: #{tpu_custom_call.1} parent=43 // pred_check
          %p1585 = pneg %p218
        $region50: #{tpu_custom_call.1} parent=43 // pred_check_branch
          %1587 = sbr.rel (%p1585) target = $region52
        $region51: #{tpu_custom_call.1} parent=43 // pred_region
          _
        $region52: #{tpu_custom_call.1} parent=43 // pred_fallthru
          _
      $region44: #{tpu_custom_call.1} parent=5 // pred_fallthru
        _
      %p1588 = scmp.le.s32.totalorder 2, %s17
      // Predicated region
      $region53: #{tpu_custom_call.1} parent=5 // pred_check
        %p1589 = pneg %p1588
      $region54: #{tpu_custom_call.1} parent=5 // pred_check_branch
        %1591 = sbr.rel (%p1589) target = $region56
      $region55: #{tpu_custom_call.1} parent=5 // pred_region
        %s1592 = ssub.s32 %s17, 2
        // Predicated region
        $region57: #{tpu_custom_call.1} parent=55 // pred_check
          %p1593 = pneg %p198
        $region58: #{tpu_custom_call.1} parent=55 // pred_check_branch
          %1595 = sbr.rel (%p1593) target = $region60
        $region59: #{tpu_custom_call.1} parent=55 // pred_region
          %s1596 = sand.u32 %s183, 1
          %s1597 = scalar_lea.sflag [#allocation4], %s1596
          %s1598 = sand.u32 %s183, 1
          %s1599 = smul.addr %s1598, 256
          %s1600 = scalar_lea.vmem [#allocation3], %s1599
          %1601 = dma.done %s1597, 4096
        $region60: #{tpu_custom_call.1} parent=55 // pred_fallthru
          _
        // Predicated region
        $region61: #{tpu_custom_call.1} parent=55 // pred_check
          %p1602 = pneg %p224
        $region62: #{tpu_custom_call.1} parent=55 // pred_check_branch
          %1604 = sbr.rel (%p1602) target = $region64
        $region63: #{tpu_custom_call.1} parent=55 // pred_region
          %p1605 = scmp.lt.s32.totalorder %s28, 1
          %s1606 = scalar_select %p1605, %s28, 1
          %s1607 = smul.addr %s1606, 32
          %s1608 = smul.addr %s1607, 8
          %s1609 = scalar_lea.vmem %s7, %s1608
        $region64: #{tpu_custom_call.1} parent=55 // pred_fallthru
          _
      $region56: #{tpu_custom_call.1} parent=5 // pred_fallthru
        _
    $region6: #{tpu_custom_call.1} parent=1 // loop_footer
      %s21 = sadd.s32 1, %s17
    $region7: #{tpu_custom_call.1} parent=1 // loop_footer_branch
      %16 = sbr.rel target = $region3
    $region8: #{tpu_custom_call.1} parent=1 // loop_exit
      _
    %1610 = vsyncpa [#allocation4], 1
    %s1611 = scalar_lea.sflag [#allocation4], 1
    %1612 = vsyncpa %s1611, 1

</llo_original>
